<compile_context>
chip_gen: v7x
topology: tpu7x:2x2x1
jax: 0.10.0
libtpu: 0.0.40
codegen_flags: <defaults>
</compile_context>

<pallas_src>
import math

import jax
import jax.numpy as jnp
from jax import lax
from jax.experimental import pallas as pl
from jax.experimental.pallas import tpu as pltpu


def _proxy_linear_kernel(xs_ref, w_ref, o_ref, inv_ref):
    # xs_ref : (tm, K)  x rows already L2-normalized, scale folded in.
    # w_ref  : (tn, K)  raw weight tile (native dtype, streamed from HBM).
    # o_ref  : (tm, tn) output tile.
    # inv_ref: (1, tn)  f32 scratch caching the per-row inverse norms of the
    #          current W tile; computed only on the first inner-M step so a
    #          resident W tile is normalized exactly once per outer-N step.

    @pl.when(pl.program_id(1) == 0)
    def _():
        w_f32 = w_ref[...].astype(jnp.float32)
        # F.normalize: w / max(||w||, eps)  ==  w * rsqrt(max(||w||^2, eps^2))
        eps2 = jnp.float32(1e-24)  # (1e-12)**2 -- F.normalize default eps, squared
        sumsq = jnp.sum(w_f32 * w_f32, axis=-1, keepdims=True)   # (tn, 1), f32
        inv = lax.rsqrt(jnp.maximum(sumsq, eps2))                # EUP slot
        inv_ref[...] = jnp.transpose(inv)                        # (1, tn) relayout

    # (tm, K) . (tn, K) contracted on K -> (tm, tn); NT form (no transpose of W),
    # MXU operands in native dtype, f32 accumulation.
    out = lax.dot_general(
        xs_ref[...],
        w_ref[...],
        dimension_numbers=(((1,), (1,)), ((), ())),
        preferred_element_type=jnp.float32,
    )
    # Scale the small accumulator by the weight row norms instead of rescaling
    # the whole (tn, K) tile.
    o_ref[...] = (out * inv_ref[...]).astype(o_ref.dtype)


def proxy_linear(x, weight, scale, *, tm=None, tn=None):
    """x: (batch, in_features), weight: (out_features, in_features) -> (batch, out_features)."""
    m, k = x.shape
    n, k2 = weight.shape
    assert k == k2, "in_features mismatch"

    # Hoist x normalization out of the tiled loop (x is tiny: batch x K) and
    # fold the scale into its per-row inverse norm:
    #   (scale * xn) @ wn.T == (xn @ wn.T) * scale
    eps = jnp.float32(1e-12)
    x_f32 = x.astype(jnp.float32)
    x_norm = jnp.sqrt(jnp.sum(x_f32 * x_f32, axis=-1, keepdims=True))
    xs = (x_f32 * (scale / jnp.maximum(x_norm, eps))).astype(x.dtype)

    # ---- tile selection -----------------------------------------------------
    if tm is None:
        tm = m if m <= 256 else 256

    w_itemsize = jnp.dtype(weight.dtype).itemsize
    x_itemsize = jnp.dtype(x.dtype).itemsize
    if tn is None:
        # W-streaming bound at small batch: target ~2 MiB per W pipeline buffer
        # (amortizes the ~0.35 us per-grid-step overhead; >85% of HBM roofline
        # needs 512+ wide tiles), lane-dense multiple of 128.
        target_bytes = 2 * 1024 * 1024
        tn = int(max(min(target_bytes // (k * w_itemsize), 4096), 256))
        tn = (tn // 128) * 128
    if tn >= n:
        tn = n  # full-dim block is always legal

    grid_m = pl.cdiv(m, tm)
    grid_n = pl.cdiv(n, tn)

    # VMEM budget derived from the actual tiles (double-buffered in/out +
    # scratch + headroom) -- valid on v5e/v6e (128 MiB) and v7x (64 MiB/TC).
    need = (2 * (tn * k * w_itemsize + tm * k * x_itemsize + tm * tn * x_itemsize)
            + 8 * tn + (1 << 16))
    vmem_limit = int(min(max(2 * need, 4 << 20), 48 << 20))

    return pl.pallas_call(
        _proxy_linear_kernel,
        out_shape=jax.ShapeDtypeStruct((m, n), x.dtype),
        grid_spec=pltpu.PrefetchScalarGridSpec(
            num_scalar_prefetch=0,
            # N outer / M inner: each W tile is fetched + normalized exactly
            # once, then reused across all M tiles (x re-fetches are tiny).
            grid=(grid_n, grid_m),
            in_specs=[
                pl.BlockSpec((tm, k), lambda j, i: (i, 0)),   # normalized+scaled x
                pl.BlockSpec((tn, k), lambda j, i: (j, 0)),   # streamed W tiles
            ],
            out_specs=pl.BlockSpec((tm, tn), lambda j, i: (i, j)),
            scratch_shapes=[pltpu.VMEM((1, tn), jnp.float32)],  # cached inv_norm row
        ),
        compiler_params=pltpu.CompilerParams(
            # Outer N axis "parallel": v7x's 2 TensorCores split the W stream.
            # Inner M axis "arbitrary": required for the inv-norm scratch cache.
            dimension_semantics=("parallel", "arbitrary"),
            vmem_limit_bytes=vmem_limit,
        ),
    )(xs, weight)


def _reference(x, weight, scale):
    eps = 1e-12
    xn = x / jnp.maximum(jnp.linalg.norm(x, axis=1, keepdims=True), eps)
    wn = weight / jnp.maximum(jnp.linalg.norm(weight, axis=1, keepdims=True), eps)
    return (xn @ wn.T) * scale


if __name__ == "__main__":
    batch = 8
    in_features = 256
    out_features = 1024
    scale = 30.0

    key = jax.random.PRNGKey(0)
    kx, kw = jax.random.split(key)

    # Deterministic input.
    x = jax.random.normal(kx, (batch, in_features), dtype=jnp.float32)

    # Deterministic kaiming_uniform_(a=sqrt(5)) init:
    # gain = sqrt(2 / (1 + a^2)) = sqrt(1/3); bound = gain * sqrt(3 / fan_in) = 1/sqrt(fan_in)
    bound = 1.0 / math.sqrt(in_features)
    weight = jax.random.uniform(
        kw, (out_features, in_features), dtype=jnp.float32, minval=-bound, maxval=bound
    )

    out = jax.jit(proxy_linear)(x, weight, scale)
    out = jax.block_until_ready(out)

    ref = _reference(x, weight, scale)
    assert out.shape == (batch, out_features)
    # lax.rsqrt may lower to the EUP approximation inside Mosaic; allow a
    # slightly looser tolerance than exact divide (outputs bounded by |scale|=30).
    assert jnp.allclose(out, ref, atol=1e-2, rtol=1e-2), "mismatch vs reference"

    print("KERNEL_OK")
</pallas_src>

<mosaic_0001>
module attributes {stable_mosaic.version = 11 : i64} {
  func.func @_proxy_linear_kernel(%arg0: i32, %arg1: i32, %arg2: memref<8x256xf32, #tpu.memory_space<vmem>>, %arg3: memref<1024x256xf32, #tpu.memory_space<vmem>>, %arg4: memref<8x1024xf32, #tpu.memory_space<vmem>>, %arg5: memref<1x1024xf32, #tpu.memory_space<vmem>>) attributes {dimension_semantics = [#tpu.dimension_semantics<parallel>, #tpu.dimension_semantics<arbitrary>], iteration_bounds = array<i64: 1, 1>, scalar_prefetch = 0 : i64, scratch_operands = 1 : i64, tpu.core_type = #tpu.core_type<tc>, window_params = [{transform_indices = @transform_0, window_bounds = array<i64: 8, 256>}, {transform_indices = @transform_1, window_bounds = array<i64: 1024, 256>}, {transform_indices = @transform_2, window_bounds = array<i64: 8, 1024>}]} {
    %c0_i32 = arith.constant 0 : i32
    %0 = arith.cmpi eq, %arg1, %c0_i32 : i32
    %1 = arith.extui %0 : i1 to i32
    %c0_i32_0 = arith.constant 0 : i32
    %2 = arith.cmpi ne, %1, %c0_i32_0 : i32
    scf.if %2 {
      %c0_8 = arith.constant 0 : index
      %c0_9 = arith.constant 0 : index
      %10 = vector.load %arg3[%c0_8, %c0_9] : memref<1024x256xf32, #tpu.memory_space<vmem>>, vector<1024x256xf32>
      %11 = arith.mulf %10, %10 : vector<1024x256xf32>
      %cst_10 = arith.constant dense<0.000000e+00> : vector<1024xf32>
      %12 = vector.multi_reduction <add>, %11, %cst_10 [1] : vector<1024x256xf32> to vector<1024xf32>
      %13 = vector.shape_cast %12 : vector<1024xf32> to vector<1024x1xf32>
      %cst_11 = arith.constant 1.000000e-24 : f32
      %14 = vector.broadcast %cst_11 : f32 to vector<1024x1xf32>
      %15 = arith.maximumf %13, %14 : vector<1024x1xf32>
      %16 = math.rsqrt %15 : vector<1024x1xf32>
      %17 = tpu.transpose %16, [1, 0] : vector<1024x1xf32> -> vector<1x1024xf32>
      %c0_12 = arith.constant 0 : index
      %c0_13 = arith.constant 0 : index
      %18 = vector.load %arg5[%c0_12, %c0_13] : memref<1x1024xf32, #tpu.memory_space<vmem>>, vector<1x1024xf32>
      tpu.vector_store %arg5[%c0_12, %c0_13], %17 {strides = array<i32>} : memref<1x1024xf32, #tpu.memory_space<vmem>>, vector<1x1024xf32>,
    } else {
    }
    %c0 = arith.constant 0 : index
    %c0_1 = arith.constant 0 : index
    %3 = vector.load %arg2[%c0, %c0_1] : memref<8x256xf32, #tpu.memory_space<vmem>>, vector<8x256xf32>
    %c0_2 = arith.constant 0 : index
    %c0_3 = arith.constant 0 : index
    %4 = vector.load %arg3[%c0_2, %c0_3] : memref<1024x256xf32, #tpu.memory_space<vmem>>, vector<1024x256xf32>
    %cst = arith.constant dense<0.000000e+00> : vector<8x1024xf32>
    %5 = tpu.matmul %3, %4, %cst {dimension_numbers = #tpu.dot_dimension_numbers<[1], [1], [0], [0], [0, 0, 1, 0], [], []>} : vector<8x256xf32>, vector<1024x256xf32>, vector<8x1024xf32> -> vector<8x1024xf32>
    %c0_4 = arith.constant 0 : index
    %c0_5 = arith.constant 0 : index
    %6 = vector.load %arg5[%c0_4, %c0_5] : memref<1x1024xf32, #tpu.memory_space<vmem>>, vector<1x1024xf32>
    %7 = vector.broadcast %6 : vector<1x1024xf32> to vector<8x1024xf32>
    %8 = arith.mulf %5, %7 : vector<8x1024xf32>
    %c0_6 = arith.constant 0 : index
    %c0_7 = arith.constant 0 : index
    %9 = vector.load %arg4[%c0_6, %c0_7] : memref<8x1024xf32, #tpu.memory_space<vmem>>, vector<8x1024xf32>
    tpu.vector_store %arg4[%c0_6, %c0_7], %8 {strides = array<i32>} : memref<8x1024xf32, #tpu.memory_space<vmem>>, vector<8x1024xf32>,
    return
  }
  func.func @transform_0(%arg0: i32, %arg1: i32) -> (i32, i32) {
    %c0_i32 = arith.constant 0 : i32
    %c0_i32_0 = arith.constant 0 : i32
    return %arg1, %c0_i32 : i32, i32
  }
  func.func @transform_1(%arg0: i32, %arg1: i32) -> (i32, i32) {
    %c0_i32 = arith.constant 0 : i32
    %c0_i32_0 = arith.constant 0 : i32
    return %arg0, %c0_i32 : i32, i32
  }
  func.func @transform_2(%arg0: i32, %arg1: i32) -> (i32, i32) {
    %c0_i32 = arith.constant 0 : i32
    return %arg1, %arg0 : i32, i32
  }
}

</mosaic_0001>

<llo_original>
// kernel: proxy_linear.1
$region0: #{proxy_linear.1}
  #allocation0 [shape = 'u32[]', space=smem, size = 0x4, offset = 0x4, fixed_abs, tag = 'smem constant byte address 0x4 - core index']
  #allocation1 [shape = 'u32[144,128]{1,0:T(1,128)}', space=vmem, size = 0x12000, scoped, tag = 'internal scratch']
  #allocation2 [shape = 'f32[1,1024]{1,0:T(1,128)}', space=vmem, size = 0x1000, scoped, tag = 'scratch operand']
  %s0 = inlined_call_operand.vmem [shape: f32[8,256], index: 0, kind: input, shape index: {}]
  %s1 = inlined_call_operand.hbm [shape: f32[1024,256], index: 1, kind: input, shape index: {}]
  %s2 = inlined_call_operand.hbm [shape: f32[8,1024], index: 2, kind: output, shape index: {}]
  %s3 = sld [smem:[#allocation0]]
  $region26: #{proxy_linear.1} parent=0
    _
  %s5 = ssub.s32 1, %s3
  %s6 = scalar_select 0, %s5, %s3
  $region1: #{proxy_linear.1} parent=0
    #allocation3 [shape = 'u8[1048576]{0}', space=vmem, size = 0x100000, scoped, tag = 'input window, operand 1, single buffered']
    #allocation4 [shape = 's32[1]{0}', space=sflag, size = 0x4, scoped, tag = 'scoped memory for proxy_linear.1']
    #allocation5 [shape = 's32[1]{0}', space=sflag, size = 0x4, scoped, tag = 'scoped memory for proxy_linear.1']
    #allocation6 [shape = 'u8[32768]{0}', space=vmem, size = 0x8000, scoped, tag = 'output window, operand 0, single buffered']
    %7 = vsyncpa [#allocation4], 0
    %8 = vsyncpa [#allocation5], 0
    // Predicated region
    $region2: #{proxy_linear.1} parent=1 // pred_check
      _
    $region3: #{proxy_linear.1} parent=1 // pred_check_branch
      %10 = sbr.rel (0) target = $region5
    $region4: #{proxy_linear.1} parent=1 // pred_region
      _
    $region5: #{proxy_linear.1} parent=1 // pred_fallthru
      _
    // Predicated region
    $region6: #{proxy_linear.1} parent=1 // pred_check
      _
    $region7: #{proxy_linear.1} parent=1 // pred_check_branch
      %12 = sbr.rel (0) target = $region9
    $region8: #{proxy_linear.1} parent=1 // pred_region
      %s14 = ssub.s32 32768, 32768
      %15 = vsyncadd [#allocation4], %s14
      %s16 = sshll.u32 [#allocation3], 4
      %s17 = int_to_ptr.vmem [resolvable:$true] %s16
      %22 = dma.hbm_to_vmem [thread:$0]  %s1, 32768, %s17, [#allocation4], 256, 256, 16
    $region9: #{proxy_linear.1} parent=1 // pred_fallthru
      _
    // Predicated region
    $region10: #{proxy_linear.1} parent=1 // pred_check
      _
    $region11: #{proxy_linear.1} parent=1 // pred_check_branch
      %24 = sbr.rel (0) target = $region13
    $region12: #{proxy_linear.1} parent=1 // pred_region
      %25 = dma.done [#allocation4], 32768
    $region13: #{proxy_linear.1} parent=1 // pred_fallthru
      _
    %p26 = scmp.eq.s32.totalorder 0, 0
    // Predicated region
    $region14: #{proxy_linear.1} parent=1 // pred_check
      %p27 = pneg %p26
    $region15: #{proxy_linear.1} parent=1 // pred_check_branch
      %29 = sbr.rel (%p27) target = $region17
    $region16: #{proxy_linear.1} parent=1 // pred_region
      %v30 = vld [vmem:[#allocation3] sm:$0xff]
      %v31 = vld [vmem:[#allocation3 + $0x8] sm:$0xff]
      %v32 = vld [vmem:[#allocation3 + $0x10] sm:$0xff]
      %v33 = vld [vmem:[#allocation3 + $0x18] sm:$0xff]
      %v34 = vld [vmem:[#allocation3 + $0x20] sm:$0xff]
      %v35 = vld [vmem:[#allocation3 + $0x28] sm:$0xff]
      %v36 = vld [vmem:[#allocation3 + $0x30] sm:$0xff]
      %v37 = vld [vmem:[#allocation3 + $0x38] sm:$0xff]
      %v38 = vld [vmem:[#allocation3 + $0x40] sm:$0xff]
      %v39 = vld [vmem:[#allocation3 + $0x48] sm:$0xff]
      %v40 = vld [vmem:[#allocation3 + $0x50] sm:$0xff]
      %v41 = vld [vmem:[#allocation3 + $0x58] sm:$0xff]
      %v42 = vld [vmem:[#allocation3 + $0x60] sm:$0xff]
      %v43 = vld [vmem:[#allocation3 + $0x68] sm:$0xff]
      %v44 = vld [vmem:[#allocation3 + $0x70] sm:$0xff]
      %v45 = vld [vmem:[#allocation3 + $0x78] sm:$0xff]
      %v46 = vld [vmem:[#allocation3 + $0x80] sm:$0xff]
      %v47 = vld [vmem:[#allocation3 + $0x88] sm:$0xff]
      %v48 = vld [vmem:[#allocation3 + $0x90] sm:$0xff]
      %v49 = vld [vmem:[#allocation3 + $0x98] sm:$0xff]
      %v50 = vld [vmem:[#allocation3 + $0xa0] sm:$0xff]
      %v51 = vld [vmem:[#allocation3 + $0xa8] sm:$0xff]
      %v52 = vld [vmem:[#allocation3 + $0xb0] sm:$0xff]
      %v53 = vld [vmem:[#allocation3 + $0xb8] sm:$0xff]
      %v54 = vld [vmem:[#allocation3 + $0xc0] sm:$0xff]
      %v55 = vld [vmem:[#allocation3 + $0xc8] sm:$0xff]
      %v56 = vld [vmem:[#allocation3 + $0xd0] sm:$0xff]
      %v57 = vld [vmem:[#allocation3 + $0xd8] sm:$0xff]
      %v58 = vld [vmem:[#allocation3 + $0xe0] sm:$0xff]
      %v59 = vld [vmem:[#allocation3 + $0xe8] sm:$0xff]
      %v60 = vld [vmem:[#allocation3 + $0xf0] sm:$0xff]
      %v61 = vld [vmem:[#allocation3 + $0xf8] sm:$0xff]
      %v62 = vld [vmem:[#allocation3 + $0x100] sm:$0xff]
      %v63 = vld [vmem:[#allocation3 + $0x108] sm:$0xff]
      %v64 = vld [vmem:[#allocation3 + $0x110] sm:$0xff]
      %v65 = vld [vmem:[#allocation3 + $0x118] sm:$0xff]
      %v66 = vld [vmem:[#allocation3 + $0x120] sm:$0xff]
      %v67 = vld [vmem:[#allocation3 + $0x128] sm:$0xff]
      %v68 = vld [vmem:[#allocation3 + $0x130] sm:$0xff]
      %v69 = vld [vmem:[#allocation3 + $0x138] sm:$0xff]
      %v70 = vld [vmem:[#allocation3 + $0x140] sm:$0xff]
      %v71 = vld [vmem:[#allocation3 + $0x148] sm:$0xff]
      %v72 = vld [vmem:[#allocation3 + $0x150] sm:$0xff]
      %v73 = vld [vmem:[#allocation3 + $0x158] sm:$0xff]
      %v74 = vld [vmem:[#allocation3 + $0x160] sm:$0xff]
      %v75 = vld [vmem:[#allocation3 + $0x168] sm:$0xff]
      %v76 = vld [vmem:[#allocation3 + $0x170] sm:$0xff]
      %v77 = vld [vmem:[#allocation3 + $0x178] sm:$0xff]
      %v78 = vld [vmem:[#allocation3 + $0x180] sm:$0xff]
      %v79 = vld [vmem:[#allocation3 + $0x188] sm:$0xff]
      %v80 = vld [vmem:[#allocation3 + $0x190] sm:$0xff]
      %v81 = vld [vmem:[#allocation3 + $0x198] sm:$0xff]
      %v82 = vld [vmem:[#allocation3 + $0x1a0] sm:$0xff]
      %v83 = vld [vmem:[#allocation3 + $0x1a8] sm:$0xff]
      %v84 = vld [vmem:[#allocation3 + $0x1b0] sm:$0xff]
      %v85 = vld [vmem:[#allocation3 + $0x1b8] sm:$0xff]
      %v86 = vld [vmem:[#allocation3 + $0x1c0] sm:$0xff]
      %v87 = vld [vmem:[#allocation3 + $0x1c8] sm:$0xff]
      %v88 = vld [vmem:[#allocation3 + $0x1d0] sm:$0xff]
      %v89 = vld [vmem:[#allocation3 + $0x1d8] sm:$0xff]
      %v90 = vld [vmem:[#allocation3 + $0x1e0] sm:$0xff]
      %v91 = vld [vmem:[#allocation3 + $0x1e8] sm:$0xff]
      %v92 = vld [vmem:[#allocation3 + $0x1f0] sm:$0xff]
      %v93 = vld [vmem:[#allocation3 + $0x1f8] sm:$0xff]
      %v94 = vld [vmem:[#allocation3 + $0x200] sm:$0xff]
      %v95 = vld [vmem:[#allocation3 + $0x208] sm:$0xff]
      %v96 = vld [vmem:[#allocation3 + $0x210] sm:$0xff]
      %v97 = vld [vmem:[#allocation3 + $0x218] sm:$0xff]
      %v98 = vld [vmem:[#allocation3 + $0x220] sm:$0xff]
      %v99 = vld [vmem:[#allocation3 + $0x228] sm:$0xff]
      %v100 = vld [vmem:[#allocation3 + $0x230] sm:$0xff]
      %v101 = vld [vmem:[#allocation3 + $0x238] sm:$0xff]
      %v102 = vld [vmem:[#allocation3 + $0x240] sm:$0xff]
      %v103 = vld [vmem:[#allocation3 + $0x248] sm:$0xff]
      %v104 = vld [vmem:[#allocation3 + $0x250] sm:$0xff]
      %v105 = vld [vmem:[#allocation3 + $0x258] sm:$0xff]
      %v106 = vld [vmem:[#allocation3 + $0x260] sm:$0xff]
      %v107 = vld [vmem:[#allocation3 + $0x268] sm:$0xff]
      %v108 = vld [vmem:[#allocation3 + $0x270] sm:$0xff]
      %v109 = vld [vmem:[#allocation3 + $0x278] sm:$0xff]
      %v110 = vld [vmem:[#allocation3 + $0x280] sm:$0xff]
      %v111 = vld [vmem:[#allocation3 + $0x288] sm:$0xff]
      %v112 = vld [vmem:[#allocation3 + $0x290] sm:$0xff]
      %v113 = vld [vmem:[#allocation3 + $0x298] sm:$0xff]
      %v114 = vld [vmem:[#allocation3 + $0x2a0] sm:$0xff]
      %v115 = vld [vmem:[#allocation3 + $0x2a8] sm:$0xff]
      %v116 = vld [vmem:[#allocation3 + $0x2b0] sm:$0xff]
      %v117 = vld [vmem:[#allocation3 + $0x2b8] sm:$0xff]
      %v118 = vld [vmem:[#allocation3 + $0x2c0] sm:$0xff]
      %v119 = vld [vmem:[#allocation3 + $0x2c8] sm:$0xff]
      %v120 = vld [vmem:[#allocation3 + $0x2d0] sm:$0xff]
      %v121 = vld [vmem:[#allocation3 + $0x2d8] sm:$0xff]
      %v122 = vld [vmem:[#allocation3 + $0x2e0] sm:$0xff]
      %v123 = vld [vmem:[#allocation3 + $0x2e8] sm:$0xff]
      %v124 = vld [vmem:[#allocation3 + $0x2f0] sm:$0xff]
      %v125 = vld [vmem:[#allocation3 + $0x2f8] sm:$0xff]
      %v126 = vld [vmem:[#allocation3 + $0x300] sm:$0xff]
      %v127 = vld [vmem:[#allocation3 + $0x308] sm:$0xff]
      %v128 = vld [vmem:[#allocation3 + $0x310] sm:$0xff]
      %v129 = vld [vmem:[#allocation3 + $0x318] sm:$0xff]
      %v130 = vld [vmem:[#allocation3 + $0x320] sm:$0xff]
      %v131 = vld [vmem:[#allocation3 + $0x328] sm:$0xff]
      %v132 = vld [vmem:[#allocation3 + $0x330] sm:$0xff]
      %v133 = vld [vmem:[#allocation3 + $0x338] sm:$0xff]
      %v134 = vld [vmem:[#allocation3 + $0x340] sm:$0xff]
      %v135 = vld [vmem:[#allocation3 + $0x348] sm:$0xff]
      %v136 = vld [vmem:[#allocation3 + $0x350] sm:$0xff]
      %v137 = vld [vmem:[#allocation3 + $0x358] sm:$0xff]
      %v138 = vld [vmem:[#allocation3 + $0x360] sm:$0xff]
      %v139 = vld [vmem:[#allocation3 + $0x368] sm:$0xff]
      %v140 = vld [vmem:[#allocation3 + $0x370] sm:$0xff]
      %v141 = vld [vmem:[#allocation3 + $0x378] sm:$0xff]
      %v142 = vld [vmem:[#allocation3 + $0x380] sm:$0xff]
      %v143 = vld [vmem:[#allocation3 + $0x388] sm:$0xff]
      %v144 = vld [vmem:[#allocation3 + $0x390] sm:$0xff]
      %v145 = vld [vmem:[#allocation3 + $0x398] sm:$0xff]
      %v146 = vld [vmem:[#allocation3 + $0x3a0] sm:$0xff]
      %v147 = vld [vmem:[#allocation3 + $0x3a8] sm:$0xff]
      %v148 = vld [vmem:[#allocation3 + $0x3b0] sm:$0xff]
      %v149 = vld [vmem:[#allocation3 + $0x3b8] sm:$0xff]
      %v150 = vld [vmem:[#allocation3 + $0x3c0] sm:$0xff]
      %v151 = vld [vmem:[#allocation3 + $0x3c8] sm:$0xff]
      %v152 = vld [vmem:[#allocation3 + $0x3d0] sm:$0xff]
      %v153 = vld [vmem:[#allocation3 + $0x3d8] sm:$0xff]
      %v154 = vld [vmem:[#allocation3 + $0x3e0] sm:$0xff]
      %v155 = vld [vmem:[#allocation3 + $0x3e8] sm:$0xff]
      %v156 = vld [vmem:[#allocation3 + $0x3f0] sm:$0xff]
      %v157 = vld [vmem:[#allocation3 + $0x3f8] sm:$0xff]
      %v158 = vld [vmem:[#allocation3 + $0x400] sm:$0xff]
      %v159 = vld [vmem:[#allocation3 + $0x408] sm:$0xff]
      %v160 = vld [vmem:[#allocation3 + $0x410] sm:$0xff]
      %v161 = vld [vmem:[#allocation3 + $0x418] sm:$0xff]
      %v162 = vld [vmem:[#allocation3 + $0x420] sm:$0xff]
      %v163 = vld [vmem:[#allocation3 + $0x428] sm:$0xff]
      %v164 = vld [vmem:[#allocation3 + $0x430] sm:$0xff]
      %v165 = vld [vmem:[#allocation3 + $0x438] sm:$0xff]
      %v166 = vld [vmem:[#allocation3 + $0x440] sm:$0xff]
      %v167 = vld [vmem:[#allocation3 + $0x448] sm:$0xff]
      %v168 = vld [vmem:[#allocation3 + $0x450] sm:$0xff]
      %v169 = vld [vmem:[#allocation3 + $0x458] sm:$0xff]
      %v170 = vld [vmem:[#allocation3 + $0x460] sm:$0xff]
      %v171 = vld [vmem:[#allocation3 + $0x468] sm:$0xff]
      %v172 = vld [vmem:[#allocation3 + $0x470] sm:$0xff]
      %v173 = vld [vmem:[#allocation3 + $0x478] sm:$0xff]
      %v174 = vld [vmem:[#allocation3 + $0x480] sm:$0xff]
      %v175 = vld [vmem:[#allocation3 + $0x488] sm:$0xff]
      %v176 = vld [vmem:[#allocation3 + $0x490] sm:$0xff]
      %v177 = vld [vmem:[#allocation3 + $0x498] sm:$0xff]
      %v178 = vld [vmem:[#allocation3 + $0x4a0] sm:$0xff]
      %v179 = vld [vmem:[#allocation3 + $0x4a8] sm:$0xff]
      %v180 = vld [vmem:[#allocation3 + $0x4b0] sm:$0xff]
      %v181 = vld [vmem:[#allocation3 + $0x4b8] sm:$0xff]
      %v182 = vld [vmem:[#allocation3 + $0x4c0] sm:$0xff]
      %v183 = vld [vmem:[#allocation3 + $0x4c8] sm:$0xff]
      %v184 = vld [vmem:[#allocation3 + $0x4d0] sm:$0xff]
      %v185 = vld [vmem:[#allocation3 + $0x4d8] sm:$0xff]
      %v186 = vld [vmem:[#allocation3 + $0x4e0] sm:$0xff]
      %v187 = vld [vmem:[#allocation3 + $0x4e8] sm:$0xff]
      %v188 = vld [vmem:[#allocation3 + $0x4f0] sm:$0xff]
      %v189 = vld [vmem:[#allocation3 + $0x4f8] sm:$0xff]
      %v190 = vld [vmem:[#allocation3 + $0x500] sm:$0xff]
      %v191 = vld [vmem:[#allocation3 + $0x508] sm:$0xff]
      %v192 = vld [vmem:[#allocation3 + $0x510] sm:$0xff]
      %v193 = vld [vmem:[#allocation3 + $0x518] sm:$0xff]
      %v194 = vld [vmem:[#allocation3 + $0x520] sm:$0xff]
      %v195 = vld [vmem:[#allocation3 + $0x528] sm:$0xff]
      %v196 = vld [vmem:[#allocation3 + $0x530] sm:$0xff]
      %v197 = vld [vmem:[#allocation3 + $0x538] sm:$0xff]
      %v198 = vld [vmem:[#allocation3 + $0x540] sm:$0xff]
      %v199 = vld [vmem:[#allocation3 + $0x548] sm:$0xff]
      %v200 = vld [vmem:[#allocation3 + $0x550] sm:$0xff]
      %v201 = vld [vmem:[#allocation3 + $0x558] sm:$0xff]
      %v202 = vld [vmem:[#allocation3 + $0x560] sm:$0xff]
      %v203 = vld [vmem:[#allocation3 + $0x568] sm:$0xff]
      %v204 = vld [vmem:[#allocation3 + $0x570] sm:$0xff]
      %v205 = vld [vmem:[#allocation3 + $0x578] sm:$0xff]
      %v206 = vld [vmem:[#allocation3 + $0x580] sm:$0xff]
      %v207 = vld [vmem:[#allocation3 + $0x588] sm:$0xff]
      %v208 = vld [vmem:[#allocation3 + $0x590] sm:$0xff]
      %v209 = vld [vmem:[#allocation3 + $0x598] sm:$0xff]
      %v210 = vld [vmem:[#allocation3 + $0x5a0] sm:$0xff]
      %v211 = vld [vmem:[#allocation3 + $0x5a8] sm:$0xff]
      %v212 = vld [vmem:[#allocation3 + $0x5b0] sm:$0xff]
      %v213 = vld [vmem:[#allocation3 + $0x5b8] sm:$0xff]
      %v214 = vld [vmem:[#allocation3 + $0x5c0] sm:$0xff]
      %v215 = vld [vmem:[#allocation3 + $0x5c8] sm:$0xff]
      %v216 = vld [vmem:[#allocation3 + $0x5d0] sm:$0xff]
      %v217 = vld [vmem:[#allocation3 + $0x5d8] sm:$0xff]
      %v218 = vld [vmem:[#allocation3 + $0x5e0] sm:$0xff]
      %v219 = vld [vmem:[#allocation3 + $0x5e8] sm:$0xff]
      %v220 = vld [vmem:[#allocation3 + $0x5f0] sm:$0xff]
      %v221 = vld [vmem:[#allocation3 + $0x5f8] sm:$0xff]
      %v222 = vld [vmem:[#allocation3 + $0x600] sm:$0xff]
      %v223 = vld [vmem:[#allocation3 + $0x608] sm:$0xff]
      %v224 = vld [vmem:[#allocation3 + $0x610] sm:$0xff]
      %v225 = vld [vmem:[#allocation3 + $0x618] sm:$0xff]
      %v226 = vld [vmem:[#allocation3 + $0x620] sm:$0xff]
      %v227 = vld [vmem:[#allocation3 + $0x628] sm:$0xff]
      %v228 = vld [vmem:[#allocation3 + $0x630] sm:$0xff]
      %v229 = vld [vmem:[#allocation3 + $0x638] sm:$0xff]
      %v230 = vld [vmem:[#allocation3 + $0x640] sm:$0xff]
      %v231 = vld [vmem:[#allocation3 + $0x648] sm:$0xff]
      %v232 = vld [vmem:[#allocation3 + $0x650] sm:$0xff]
      %v233 = vld [vmem:[#allocation3 + $0x658] sm:$0xff]
      %v234 = vld [vmem:[#allocation3 + $0x660] sm:$0xff]
      %v235 = vld [vmem:[#allocation3 + $0x668] sm:$0xff]
      %v236 = vld [vmem:[#allocation3 + $0x670] sm:$0xff]
      %v237 = vld [vmem:[#allocation3 + $0x678] sm:$0xff]
      %v238 = vld [vmem:[#allocation3 + $0x680] sm:$0xff]
      %v239 = vld [vmem:[#allocation3 + $0x688] sm:$0xff]
      %v240 = vld [vmem:[#allocation3 + $0x690] sm:$0xff]
      %v241 = vld [vmem:[#allocation3 + $0x698] sm:$0xff]
      %v242 = vld [vmem:[#allocation3 + $0x6a0] sm:$0xff]
      %v243 = vld [vmem:[#allocation3 + $0x6a8] sm:$0xff]
      %v244 = vld [vmem:[#allocation3 + $0x6b0] sm:$0xff]
      %v245 = vld [vmem:[#allocation3 + $0x6b8] sm:$0xff]
      %v246 = vld [vmem:[#allocation3 + $0x6c0] sm:$0xff]
      %v247 = vld [vmem:[#allocation3 + $0x6c8] sm:$0xff]
      %v248 = vld [vmem:[#allocation3 + $0x6d0] sm:$0xff]
      %v249 = vld [vmem:[#allocation3 + $0x6d8] sm:$0xff]
      %v250 = vld [vmem:[#allocation3 + $0x6e0] sm:$0xff]
      %v251 = vld [vmem:[#allocation3 + $0x6e8] sm:$0xff]
      %v252 = vld [vmem:[#allocation3 + $0x6f0] sm:$0xff]
      %v253 = vld [vmem:[#allocation3 + $0x6f8] sm:$0xff]
      %v254 = vld [vmem:[#allocation3 + $0x700] sm:$0xff]
      %v255 = vld [vmem:[#allocation3 + $0x708] sm:$0xff]
      %v256 = vld [vmem:[#allocation3 + $0x710] sm:$0xff]
      %v257 = vld [vmem:[#allocation3 + $0x718] sm:$0xff]
      %v258 = vld [vmem:[#allocation3 + $0x720] sm:$0xff]
      %v259 = vld [vmem:[#allocation3 + $0x728] sm:$0xff]
      %v260 = vld [vmem:[#allocation3 + $0x730] sm:$0xff]
      %v261 = vld [vmem:[#allocation3 + $0x738] sm:$0xff]
      %v262 = vld [vmem:[#allocation3 + $0x740] sm:$0xff]
      %v263 = vld [vmem:[#allocation3 + $0x748] sm:$0xff]
      %v264 = vld [vmem:[#allocation3 + $0x750] sm:$0xff]
      %v265 = vld [vmem:[#allocation3 + $0x758] sm:$0xff]
      %v266 = vld [vmem:[#allocation3 + $0x760] sm:$0xff]
      %v267 = vld [vmem:[#allocation3 + $0x768] sm:$0xff]
      %v268 = vld [vmem:[#allocation3 + $0x770] sm:$0xff]
      %v269 = vld [vmem:[#allocation3 + $0x778] sm:$0xff]
      %v270 = vld [vmem:[#allocation3 + $0x780] sm:$0xff]
      %v271 = vld [vmem:[#allocation3 + $0x788] sm:$0xff]
      %v272 = vld [vmem:[#allocation3 + $0x790] sm:$0xff]
      %v273 = vld [vmem:[#allocation3 + $0x798] sm:$0xff]
      %v274 = vld [vmem:[#allocation3 + $0x7a0] sm:$0xff]
      %v275 = vld [vmem:[#allocation3 + $0x7a8] sm:$0xff]
      %v276 = vld [vmem:[#allocation3 + $0x7b0] sm:$0xff]
      %v277 = vld [vmem:[#allocation3 + $0x7b8] sm:$0xff]
      %v278 = vld [vmem:[#allocation3 + $0x7c0] sm:$0xff]
      %v279 = vld [vmem:[#allocation3 + $0x7c8] sm:$0xff]
      %v280 = vld [vmem:[#allocation3 + $0x7d0] sm:$0xff]
      %v281 = vld [vmem:[#allocation3 + $0x7d8] sm:$0xff]
      %v282 = vld [vmem:[#allocation3 + $0x7e0] sm:$0xff]
      %v283 = vld [vmem:[#allocation3 + $0x7e8] sm:$0xff]
      %v284 = vld [vmem:[#allocation3 + $0x7f0] sm:$0xff]
      %v285 = vld [vmem:[#allocation3 + $0x7f8] sm:$0xff]
      %v286 = vmul.f32 %v30, %v30
      %v287 = vmul.f32 %v31, %v31
      %v288 = vmul.f32 %v32, %v32
      %v289 = vmul.f32 %v33, %v33
      %v290 = vmul.f32 %v34, %v34
      %v291 = vmul.f32 %v35, %v35
      %v292 = vmul.f32 %v36, %v36
      %v293 = vmul.f32 %v37, %v37
      %v294 = vmul.f32 %v38, %v38
      %v295 = vmul.f32 %v39, %v39
      %v296 = vmul.f32 %v40, %v40
      %v297 = vmul.f32 %v41, %v41
      %v298 = vmul.f32 %v42, %v42
      %v299 = vmul.f32 %v43, %v43
      %v300 = vmul.f32 %v44, %v44
      %v301 = vmul.f32 %v45, %v45
      %v302 = vmul.f32 %v46, %v46
      %v303 = vmul.f32 %v47, %v47
      %v304 = vmul.f32 %v48, %v48
      %v305 = vmul.f32 %v49, %v49
      %v306 = vmul.f32 %v50, %v50
      %v307 = vmul.f32 %v51, %v51
      %v308 = vmul.f32 %v52, %v52
      %v309 = vmul.f32 %v53, %v53
      %v310 = vmul.f32 %v54, %v54
      %v311 = vmul.f32 %v55, %v55
      %v312 = vmul.f32 %v56, %v56
      %v313 = vmul.f32 %v57, %v57
      %v314 = vmul.f32 %v58, %v58
      %v315 = vmul.f32 %v59, %v59
      %v316 = vmul.f32 %v60, %v60
      %v317 = vmul.f32 %v61, %v61
      %v318 = vmul.f32 %v62, %v62
      %v319 = vmul.f32 %v63, %v63
      %v320 = vmul.f32 %v64, %v64
      %v321 = vmul.f32 %v65, %v65
      %v322 = vmul.f32 %v66, %v66
      %v323 = vmul.f32 %v67, %v67
      %v324 = vmul.f32 %v68, %v68
      %v325 = vmul.f32 %v69, %v69
      %v326 = vmul.f32 %v70, %v70
      %v327 = vmul.f32 %v71, %v71
      %v328 = vmul.f32 %v72, %v72
      %v329 = vmul.f32 %v73, %v73
      %v330 = vmul.f32 %v74, %v74
      %v331 = vmul.f32 %v75, %v75
      %v332 = vmul.f32 %v76, %v76
      %v333 = vmul.f32 %v77, %v77
      %v334 = vmul.f32 %v78, %v78
      %v335 = vmul.f32 %v79, %v79
      %v336 = vmul.f32 %v80, %v80
      %v337 = vmul.f32 %v81, %v81
      %v338 = vmul.f32 %v82, %v82
      %v339 = vmul.f32 %v83, %v83
      %v340 = vmul.f32 %v84, %v84
      %v341 = vmul.f32 %v85, %v85
      %v342 = vmul.f32 %v86, %v86
      %v343 = vmul.f32 %v87, %v87
      %v344 = vmul.f32 %v88, %v88
      %v345 = vmul.f32 %v89, %v89
      %v346 = vmul.f32 %v90, %v90
      %v347 = vmul.f32 %v91, %v91
      %v348 = vmul.f32 %v92, %v92
      %v349 = vmul.f32 %v93, %v93
      %v350 = vmul.f32 %v94, %v94
      %v351 = vmul.f32 %v95, %v95
      %v352 = vmul.f32 %v96, %v96
      %v353 = vmul.f32 %v97, %v97
      %v354 = vmul.f32 %v98, %v98
      %v355 = vmul.f32 %v99, %v99
      %v356 = vmul.f32 %v100, %v100
      %v357 = vmul.f32 %v101, %v101
      %v358 = vmul.f32 %v102, %v102
      %v359 = vmul.f32 %v103, %v103
      %v360 = vmul.f32 %v104, %v104
      %v361 = vmul.f32 %v105, %v105
      %v362 = vmul.f32 %v106, %v106
      %v363 = vmul.f32 %v107, %v107
      %v364 = vmul.f32 %v108, %v108
      %v365 = vmul.f32 %v109, %v109
      %v366 = vmul.f32 %v110, %v110
      %v367 = vmul.f32 %v111, %v111
      %v368 = vmul.f32 %v112, %v112
      %v369 = vmul.f32 %v113, %v113
      %v370 = vmul.f32 %v114, %v114
      %v371 = vmul.f32 %v115, %v115
      %v372 = vmul.f32 %v116, %v116
      %v373 = vmul.f32 %v117, %v117
      %v374 = vmul.f32 %v118, %v118
      %v375 = vmul.f32 %v119, %v119
      %v376 = vmul.f32 %v120, %v120
      %v377 = vmul.f32 %v121, %v121
      %v378 = vmul.f32 %v122, %v122
      %v379 = vmul.f32 %v123, %v123
      %v380 = vmul.f32 %v124, %v124
      %v381 = vmul.f32 %v125, %v125
      %v382 = vmul.f32 %v126, %v126
      %v383 = vmul.f32 %v127, %v127
      %v384 = vmul.f32 %v128, %v128
      %v385 = vmul.f32 %v129, %v129
      %v386 = vmul.f32 %v130, %v130
      %v387 = vmul.f32 %v131, %v131
      %v388 = vmul.f32 %v132, %v132
      %v389 = vmul.f32 %v133, %v133
      %v390 = vmul.f32 %v134, %v134
      %v391 = vmul.f32 %v135, %v135
      %v392 = vmul.f32 %v136, %v136
      %v393 = vmul.f32 %v137, %v137
      %v394 = vmul.f32 %v138, %v138
      %v395 = vmul.f32 %v139, %v139
      %v396 = vmul.f32 %v140, %v140
      %v397 = vmul.f32 %v141, %v141
      %v398 = vmul.f32 %v142, %v142
      %v399 = vmul.f32 %v143, %v143
      %v400 = vmul.f32 %v144, %v144
      %v401 = vmul.f32 %v145, %v145
      %v402 = vmul.f32 %v146, %v146
      %v403 = vmul.f32 %v147, %v147
      %v404 = vmul.f32 %v148, %v148
      %v405 = vmul.f32 %v149, %v149
      %v406 = vmul.f32 %v150, %v150
      %v407 = vmul.f32 %v151, %v151
      %v408 = vmul.f32 %v152, %v152
      %v409 = vmul.f32 %v153, %v153
      %v410 = vmul.f32 %v154, %v154
      %v411 = vmul.f32 %v155, %v155
      %v412 = vmul.f32 %v156, %v156
      %v413 = vmul.f32 %v157, %v157
      %v414 = vmul.f32 %v158, %v158
      %v415 = vmul.f32 %v159, %v159
      %v416 = vmul.f32 %v160, %v160
      %v417 = vmul.f32 %v161, %v161
      %v418 = vmul.f32 %v162, %v162
      %v419 = vmul.f32 %v163, %v163
      %v420 = vmul.f32 %v164, %v164
      %v421 = vmul.f32 %v165, %v165
      %v422 = vmul.f32 %v166, %v166
      %v423 = vmul.f32 %v167, %v167
      %v424 = vmul.f32 %v168, %v168
      %v425 = vmul.f32 %v169, %v169
      %v426 = vmul.f32 %v170, %v170
      %v427 = vmul.f32 %v171, %v171
      %v428 = vmul.f32 %v172, %v172
      %v429 = vmul.f32 %v173, %v173
      %v430 = vmul.f32 %v174, %v174
      %v431 = vmul.f32 %v175, %v175
      %v432 = vmul.f32 %v176, %v176
      %v433 = vmul.f32 %v177, %v177
      %v434 = vmul.f32 %v178, %v178
      %v435 = vmul.f32 %v179, %v179
      %v436 = vmul.f32 %v180, %v180
      %v437 = vmul.f32 %v181, %v181
      %v438 = vmul.f32 %v182, %v182
      %v439 = vmul.f32 %v183, %v183
      %v440 = vmul.f32 %v184, %v184
      %v441 = vmul.f32 %v185, %v185
      %v442 = vmul.f32 %v186, %v186
      %v443 = vmul.f32 %v187, %v187
      %v444 = vmul.f32 %v188, %v188
      %v445 = vmul.f32 %v189, %v189
      %v446 = vmul.f32 %v190, %v190
      %v447 = vmul.f32 %v191, %v191
      %v448 = vmul.f32 %v192, %v192
      %v449 = vmul.f32 %v193, %v193
      %v450 = vmul.f32 %v194, %v194
      %v451 = vmul.f32 %v195, %v195
      %v452 = vmul.f32 %v196, %v196
      %v453 = vmul.f32 %v197, %v197
      %v454 = vmul.f32 %v198, %v198
      %v455 = vmul.f32 %v199, %v199
      %v456 = vmul.f32 %v200, %v200
      %v457 = vmul.f32 %v201, %v201
      %v458 = vmul.f32 %v202, %v202
      %v459 = vmul.f32 %v203, %v203
      %v460 = vmul.f32 %v204, %v204
      %v461 = vmul.f32 %v205, %v205
      %v462 = vmul.f32 %v206, %v206
      %v463 = vmul.f32 %v207, %v207
      %v464 = vmul.f32 %v208, %v208
      %v465 = vmul.f32 %v209, %v209
      %v466 = vmul.f32 %v210, %v210
      %v467 = vmul.f32 %v211, %v211
      %v468 = vmul.f32 %v212, %v212
      %v469 = vmul.f32 %v213, %v213
      %v470 = vmul.f32 %v214, %v214
      %v471 = vmul.f32 %v215, %v215
      %v472 = vmul.f32 %v216, %v216
      %v473 = vmul.f32 %v217, %v217
      %v474 = vmul.f32 %v218, %v218
      %v475 = vmul.f32 %v219, %v219
      %v476 = vmul.f32 %v220, %v220
      %v477 = vmul.f32 %v221, %v221
      %v478 = vmul.f32 %v222, %v222
      %v479 = vmul.f32 %v223, %v223
      %v480 = vmul.f32 %v224, %v224
      %v481 = vmul.f32 %v225, %v225
      %v482 = vmul.f32 %v226, %v226
      %v483 = vmul.f32 %v227, %v227
      %v484 = vmul.f32 %v228, %v228
      %v485 = vmul.f32 %v229, %v229
      %v486 = vmul.f32 %v230, %v230
      %v487 = vmul.f32 %v231, %v231
      %v488 = vmul.f32 %v232, %v232
      %v489 = vmul.f32 %v233, %v233
      %v490 = vmul.f32 %v234, %v234
      %v491 = vmul.f32 %v235, %v235
      %v492 = vmul.f32 %v236, %v236
      %v493 = vmul.f32 %v237, %v237
      %v494 = vmul.f32 %v238, %v238
      %v495 = vmul.f32 %v239, %v239
      %v496 = vmul.f32 %v240, %v240
      %v497 = vmul.f32 %v241, %v241
      %v498 = vmul.f32 %v242, %v242
      %v499 = vmul.f32 %v243, %v243
      %v500 = vmul.f32 %v244, %v244
      %v501 = vmul.f32 %v245, %v245
      %v502 = vmul.f32 %v246, %v246
      %v503 = vmul.f32 %v247, %v247
      %v504 = vmul.f32 %v248, %v248
      %v505 = vmul.f32 %v249, %v249
      %v506 = vmul.f32 %v250, %v250
      %v507 = vmul.f32 %v251, %v251
      %v508 = vmul.f32 %v252, %v252
      %v509 = vmul.f32 %v253, %v253
      %v510 = vmul.f32 %v254, %v254
      %v511 = vmul.f32 %v255, %v255
      %v512 = vmul.f32 %v256, %v256
      %v513 = vmul.f32 %v257, %v257
      %v514 = vmul.f32 %v258, %v258
      %v515 = vmul.f32 %v259, %v259
      %v516 = vmul.f32 %v260, %v260
      %v517 = vmul.f32 %v261, %v261
      %v518 = vmul.f32 %v262, %v262
      %v519 = vmul.f32 %v263, %v263
      %v520 = vmul.f32 %v264, %v264
      %v521 = vmul.f32 %v265, %v265
      %v522 = vmul.f32 %v266, %v266
      %v523 = vmul.f32 %v267, %v267
      %v524 = vmul.f32 %v268, %v268
      %v525 = vmul.f32 %v269, %v269
      %v526 = vmul.f32 %v270, %v270
      %v527 = vmul.f32 %v271, %v271
      %v528 = vmul.f32 %v272, %v272
      %v529 = vmul.f32 %v273, %v273
      %v530 = vmul.f32 %v274, %v274
      %v531 = vmul.f32 %v275, %v275
      %v532 = vmul.f32 %v276, %v276
      %v533 = vmul.f32 %v277, %v277
      %v534 = vmul.f32 %v278, %v278
      %v535 = vmul.f32 %v279, %v279
      %v536 = vmul.f32 %v280, %v280
      %v537 = vmul.f32 %v281, %v281
      %v538 = vmul.f32 %v282, %v282
      %v539 = vmul.f32 %v283, %v283
      %v540 = vmul.f32 %v284, %v284
      %v541 = vmul.f32 %v285, %v285
      %v542 = vadd.f32 %v286, %v287
      %543 = vadd.xlane.f32.xlu0 %v542
      %v544 = vpop.xlane.xlu0 %543
      %v545 = vadd.f32 %v288, %v289
      %546 = vadd.xlane.f32.xlu0 %v545
      %v547 = vpop.xlane.xlu0 %546
      %v548 = vadd.f32 %v290, %v291
      %549 = vadd.xlane.f32.xlu0 %v548
      %v550 = vpop.xlane.xlu0 %549
      %v551 = vadd.f32 %v292, %v293
      %552 = vadd.xlane.f32.xlu0 %v551
      %v553 = vpop.xlane.xlu0 %552
      %v554 = vadd.f32 %v294, %v295
      %555 = vadd.xlane.f32.xlu0 %v554
      %v556 = vpop.xlane.xlu0 %555
      %v557 = vadd.f32 %v296, %v297
      %558 = vadd.xlane.f32.xlu0 %v557
      %v559 = vpop.xlane.xlu0 %558
      %v560 = vadd.f32 %v298, %v299
      %561 = vadd.xlane.f32.xlu0 %v560
      %v562 = vpop.xlane.xlu0 %561
      %v563 = vadd.f32 %v300, %v301
      %564 = vadd.xlane.f32.xlu0 %v563
      %v565 = vpop.xlane.xlu0 %564
      %v566 = vadd.f32 %v302, %v303
      %567 = vadd.xlane.f32.xlu0 %v566
      %v568 = vpop.xlane.xlu0 %567
      %v569 = vadd.f32 %v304, %v305
      %570 = vadd.xlane.f32.xlu0 %v569
      %v571 = vpop.xlane.xlu0 %570
      %v572 = vadd.f32 %v306, %v307
      %573 = vadd.xlane.f32.xlu0 %v572
      %v574 = vpop.xlane.xlu0 %573
      %v575 = vadd.f32 %v308, %v309
      %576 = vadd.xlane.f32.xlu0 %v575
      %v577 = vpop.xlane.xlu0 %576
      %v578 = vadd.f32 %v310, %v311
      %579 = vadd.xlane.f32.xlu0 %v578
      %v580 = vpop.xlane.xlu0 %579
      %v581 = vadd.f32 %v312, %v313
      %582 = vadd.xlane.f32.xlu0 %v581
      %v583 = vpop.xlane.xlu0 %582
      %v584 = vadd.f32 %v314, %v315
      %585 = vadd.xlane.f32.xlu0 %v584
      %v586 = vpop.xlane.xlu0 %585
      %v587 = vadd.f32 %v316, %v317
      %588 = vadd.xlane.f32.xlu0 %v587
      %v589 = vpop.xlane.xlu0 %588
      %v590 = vadd.f32 %v318, %v319
      %591 = vadd.xlane.f32.xlu0 %v590
      %v592 = vpop.xlane.xlu0 %591
      %v593 = vadd.f32 %v320, %v321
      %594 = vadd.xlane.f32.xlu0 %v593
      %v595 = vpop.xlane.xlu0 %594
      %v596 = vadd.f32 %v322, %v323
      %597 = vadd.xlane.f32.xlu0 %v596
      %v598 = vpop.xlane.xlu0 %597
      %v599 = vadd.f32 %v324, %v325
      %600 = vadd.xlane.f32.xlu0 %v599
      %v601 = vpop.xlane.xlu0 %600
      %v602 = vadd.f32 %v326, %v327
      %603 = vadd.xlane.f32.xlu0 %v602
      %v604 = vpop.xlane.xlu0 %603
      %v605 = vadd.f32 %v328, %v329
      %606 = vadd.xlane.f32.xlu0 %v605
      %v607 = vpop.xlane.xlu0 %606
      %v608 = vadd.f32 %v330, %v331
      %609 = vadd.xlane.f32.xlu0 %v608
      %v610 = vpop.xlane.xlu0 %609
      %v611 = vadd.f32 %v332, %v333
      %612 = vadd.xlane.f32.xlu0 %v611
      %v613 = vpop.xlane.xlu0 %612
      %v614 = vadd.f32 %v334, %v335
      %615 = vadd.xlane.f32.xlu0 %v614
      %v616 = vpop.xlane.xlu0 %615
      %v617 = vadd.f32 %v336, %v337
      %618 = vadd.xlane.f32.xlu0 %v617
      %v619 = vpop.xlane.xlu0 %618
      %v620 = vadd.f32 %v338, %v339
      %621 = vadd.xlane.f32.xlu0 %v620
      %v622 = vpop.xlane.xlu0 %621
      %v623 = vadd.f32 %v340, %v341
      %624 = vadd.xlane.f32.xlu0 %v623
      %v625 = vpop.xlane.xlu0 %624
      %v626 = vadd.f32 %v342, %v343
      %627 = vadd.xlane.f32.xlu0 %v626
      %v628 = vpop.xlane.xlu0 %627
      %v629 = vadd.f32 %v344, %v345
      %630 = vadd.xlane.f32.xlu0 %v629
      %v631 = vpop.xlane.xlu0 %630
      %v632 = vadd.f32 %v346, %v347
      %633 = vadd.xlane.f32.xlu0 %v632
      %v634 = vpop.xlane.xlu0 %633
      %v635 = vadd.f32 %v348, %v349
      %636 = vadd.xlane.f32.xlu0 %v635
      %v637 = vpop.xlane.xlu0 %636
      %v638 = vadd.f32 %v350, %v351
      %639 = vadd.xlane.f32.xlu0 %v638
      %v640 = vpop.xlane.xlu0 %639
      %v641 = vadd.f32 %v352, %v353
      %642 = vadd.xlane.f32.xlu0 %v641
      %v643 = vpop.xlane.xlu0 %642
      %v644 = vadd.f32 %v354, %v355
      %645 = vadd.xlane.f32.xlu0 %v644
      %v646 = vpop.xlane.xlu0 %645
      %v647 = vadd.f32 %v356, %v357
      %648 = vadd.xlane.f32.xlu0 %v647
      %v649 = vpop.xlane.xlu0 %648
      %v650 = vadd.f32 %v358, %v359
      %651 = vadd.xlane.f32.xlu0 %v650
      %v652 = vpop.xlane.xlu0 %651
      %v653 = vadd.f32 %v360, %v361
      %654 = vadd.xlane.f32.xlu0 %v653
      %v655 = vpop.xlane.xlu0 %654
      %v656 = vadd.f32 %v362, %v363
      %657 = vadd.xlane.f32.xlu0 %v656
      %v658 = vpop.xlane.xlu0 %657
      %v659 = vadd.f32 %v364, %v365
      %660 = vadd.xlane.f32.xlu0 %v659
      %v661 = vpop.xlane.xlu0 %660
      %v662 = vadd.f32 %v366, %v367
      %663 = vadd.xlane.f32.xlu0 %v662
      %v664 = vpop.xlane.xlu0 %663
      %v665 = vadd.f32 %v368, %v369
      %666 = vadd.xlane.f32.xlu0 %v665
      %v667 = vpop.xlane.xlu0 %666
      %v668 = vadd.f32 %v370, %v371
      %669 = vadd.xlane.f32.xlu0 %v668
      %v670 = vpop.xlane.xlu0 %669
      %v671 = vadd.f32 %v372, %v373
      %672 = vadd.xlane.f32.xlu0 %v671
      %v673 = vpop.xlane.xlu0 %672
      %v674 = vadd.f32 %v374, %v375
      %675 = vadd.xlane.f32.xlu0 %v674
      %v676 = vpop.xlane.xlu0 %675
      %v677 = vadd.f32 %v376, %v377
      %678 = vadd.xlane.f32.xlu0 %v677
      %v679 = vpop.xlane.xlu0 %678
      %v680 = vadd.f32 %v378, %v379
      %681 = vadd.xlane.f32.xlu0 %v680
      %v682 = vpop.xlane.xlu0 %681
      %v683 = vadd.f32 %v380, %v381
      %684 = vadd.xlane.f32.xlu0 %v683
      %v685 = vpop.xlane.xlu0 %684
      %v686 = vadd.f32 %v382, %v383
      %687 = vadd.xlane.f32.xlu0 %v686
      %v688 = vpop.xlane.xlu0 %687
      %v689 = vadd.f32 %v384, %v385
      %690 = vadd.xlane.f32.xlu0 %v689
      %v691 = vpop.xlane.xlu0 %690
      %v692 = vadd.f32 %v386, %v387
      %693 = vadd.xlane.f32.xlu0 %v692
      %v694 = vpop.xlane.xlu0 %693
      %v695 = vadd.f32 %v388, %v389
      %696 = vadd.xlane.f32.xlu0 %v695
      %v697 = vpop.xlane.xlu0 %696
      %v698 = vadd.f32 %v390, %v391
      %699 = vadd.xlane.f32.xlu0 %v698
      %v700 = vpop.xlane.xlu0 %699
      %v701 = vadd.f32 %v392, %v393
      %702 = vadd.xlane.f32.xlu0 %v701
      %v703 = vpop.xlane.xlu0 %702
      %v704 = vadd.f32 %v394, %v395
      %705 = vadd.xlane.f32.xlu0 %v704
      %v706 = vpop.xlane.xlu0 %705
      %v707 = vadd.f32 %v396, %v397
      %708 = vadd.xlane.f32.xlu0 %v707
      %v709 = vpop.xlane.xlu0 %708
      %v710 = vadd.f32 %v398, %v399
      %711 = vadd.xlane.f32.xlu0 %v710
      %v712 = vpop.xlane.xlu0 %711
      %v713 = vadd.f32 %v400, %v401
      %714 = vadd.xlane.f32.xlu0 %v713
      %v715 = vpop.xlane.xlu0 %714
      %v716 = vadd.f32 %v402, %v403
      %717 = vadd.xlane.f32.xlu0 %v716
      %v718 = vpop.xlane.xlu0 %717
      %v719 = vadd.f32 %v404, %v405
      %720 = vadd.xlane.f32.xlu0 %v719
      %v721 = vpop.xlane.xlu0 %720
      %v722 = vadd.f32 %v406, %v407
      %723 = vadd.xlane.f32.xlu0 %v722
      %v724 = vpop.xlane.xlu0 %723
      %v725 = vadd.f32 %v408, %v409
      %726 = vadd.xlane.f32.xlu0 %v725
      %v727 = vpop.xlane.xlu0 %726
      %v728 = vadd.f32 %v410, %v411
      %729 = vadd.xlane.f32.xlu0 %v728
      %v730 = vpop.xlane.xlu0 %729
      %v731 = vadd.f32 %v412, %v413
      %732 = vadd.xlane.f32.xlu0 %v731
      %v733 = vpop.xlane.xlu0 %732
      %v734 = vadd.f32 %v414, %v415
      %735 = vadd.xlane.f32.xlu0 %v734
      %v736 = vpop.xlane.xlu0 %735
      %v737 = vadd.f32 %v416, %v417
      %738 = vadd.xlane.f32.xlu0 %v737
      %v739 = vpop.xlane.xlu0 %738
      %v740 = vadd.f32 %v418, %v419
      %741 = vadd.xlane.f32.xlu0 %v740
      %v742 = vpop.xlane.xlu0 %741
      %v743 = vadd.f32 %v420, %v421
      %744 = vadd.xlane.f32.xlu0 %v743
      %v745 = vpop.xlane.xlu0 %744
      %v746 = vadd.f32 %v422, %v423
      %747 = vadd.xlane.f32.xlu0 %v746
      %v748 = vpop.xlane.xlu0 %747
      %v749 = vadd.f32 %v424, %v425
      %750 = vadd.xlane.f32.xlu0 %v749
      %v751 = vpop.xlane.xlu0 %750
      %v752 = vadd.f32 %v426, %v427
      %753 = vadd.xlane.f32.xlu0 %v752
      %v754 = vpop.xlane.xlu0 %753
      %v755 = vadd.f32 %v428, %v429
      %756 = vadd.xlane.f32.xlu0 %v755
      %v757 = vpop.xlane.xlu0 %756
      %v758 = vadd.f32 %v430, %v431
      %759 = vadd.xlane.f32.xlu0 %v758
      %v760 = vpop.xlane.xlu0 %759
      %v761 = vadd.f32 %v432, %v433
      %762 = vadd.xlane.f32.xlu0 %v761
      %v763 = vpop.xlane.xlu0 %762
      %v764 = vadd.f32 %v434, %v435
      %765 = vadd.xlane.f32.xlu0 %v764
      %v766 = vpop.xlane.xlu0 %765
      %v767 = vadd.f32 %v436, %v437
      %768 = vadd.xlane.f32.xlu0 %v767
      %v769 = vpop.xlane.xlu0 %768
      %v770 = vadd.f32 %v438, %v439
      %771 = vadd.xlane.f32.xlu0 %v770
      %v772 = vpop.xlane.xlu0 %771
      %v773 = vadd.f32 %v440, %v441
      %774 = vadd.xlane.f32.xlu0 %v773
      %v775 = vpop.xlane.xlu0 %774
      %v776 = vadd.f32 %v442, %v443
      %777 = vadd.xlane.f32.xlu0 %v776
      %v778 = vpop.xlane.xlu0 %777
      %v779 = vadd.f32 %v444, %v445
      %780 = vadd.xlane.f32.xlu0 %v779
      %v781 = vpop.xlane.xlu0 %780
      %v782 = vadd.f32 %v446, %v447
      %783 = vadd.xlane.f32.xlu0 %v782
      %v784 = vpop.xlane.xlu0 %783
      %v785 = vadd.f32 %v448, %v449
      %786 = vadd.xlane.f32.xlu0 %v785
      %v787 = vpop.xlane.xlu0 %786
      %v788 = vadd.f32 %v450, %v451
      %789 = vadd.xlane.f32.xlu0 %v788
      %v790 = vpop.xlane.xlu0 %789
      %v791 = vadd.f32 %v452, %v453
      %792 = vadd.xlane.f32.xlu0 %v791
      %v793 = vpop.xlane.xlu0 %792
      %v794 = vadd.f32 %v454, %v455
      %795 = vadd.xlane.f32.xlu0 %v794
      %v796 = vpop.xlane.xlu0 %795
      %v797 = vadd.f32 %v456, %v457
      %798 = vadd.xlane.f32.xlu0 %v797
      %v799 = vpop.xlane.xlu0 %798
      %v800 = vadd.f32 %v458, %v459
      %801 = vadd.xlane.f32.xlu0 %v800
      %v802 = vpop.xlane.xlu0 %801
      %v803 = vadd.f32 %v460, %v461
      %804 = vadd.xlane.f32.xlu0 %v803
      %v805 = vpop.xlane.xlu0 %804
      %v806 = vadd.f32 %v462, %v463
      %807 = vadd.xlane.f32.xlu0 %v806
      %v808 = vpop.xlane.xlu0 %807
      %v809 = vadd.f32 %v464, %v465
      %810 = vadd.xlane.f32.xlu0 %v809
      %v811 = vpop.xlane.xlu0 %810
      %v812 = vadd.f32 %v466, %v467
      %813 = vadd.xlane.f32.xlu0 %v812
      %v814 = vpop.xlane.xlu0 %813
      %v815 = vadd.f32 %v468, %v469
      %816 = vadd.xlane.f32.xlu0 %v815
      %v817 = vpop.xlane.xlu0 %816
      %v818 = vadd.f32 %v470, %v471
      %819 = vadd.xlane.f32.xlu0 %v818
      %v820 = vpop.xlane.xlu0 %819
      %v821 = vadd.f32 %v472, %v473
      %822 = vadd.xlane.f32.xlu0 %v821
      %v823 = vpop.xlane.xlu0 %822
      %v824 = vadd.f32 %v474, %v475
      %825 = vadd.xlane.f32.xlu0 %v824
      %v826 = vpop.xlane.xlu0 %825
      %v827 = vadd.f32 %v476, %v477
      %828 = vadd.xlane.f32.xlu0 %v827
      %v829 = vpop.xlane.xlu0 %828
      %v830 = vadd.f32 %v478, %v479
      %831 = vadd.xlane.f32.xlu0 %v830
      %v832 = vpop.xlane.xlu0 %831
      %v833 = vadd.f32 %v480, %v481
      %834 = vadd.xlane.f32.xlu0 %v833
      %v835 = vpop.xlane.xlu0 %834
      %v836 = vadd.f32 %v482, %v483
      %837 = vadd.xlane.f32.xlu0 %v836
      %v838 = vpop.xlane.xlu0 %837
      %v839 = vadd.f32 %v484, %v485
      %840 = vadd.xlane.f32.xlu0 %v839
      %v841 = vpop.xlane.xlu0 %840
      %v842 = vadd.f32 %v486, %v487
      %843 = vadd.xlane.f32.xlu0 %v842
      %v844 = vpop.xlane.xlu0 %843
      %v845 = vadd.f32 %v488, %v489
      %846 = vadd.xlane.f32.xlu0 %v845
      %v847 = vpop.xlane.xlu0 %846
      %v848 = vadd.f32 %v490, %v491
      %849 = vadd.xlane.f32.xlu0 %v848
      %v850 = vpop.xlane.xlu0 %849
      %v851 = vadd.f32 %v492, %v493
      %852 = vadd.xlane.f32.xlu0 %v851
      %v853 = vpop.xlane.xlu0 %852
      %v854 = vadd.f32 %v494, %v495
      %855 = vadd.xlane.f32.xlu0 %v854
      %v856 = vpop.xlane.xlu0 %855
      %v857 = vadd.f32 %v496, %v497
      %858 = vadd.xlane.f32.xlu0 %v857
      %v859 = vpop.xlane.xlu0 %858
      %v860 = vadd.f32 %v498, %v499
      %861 = vadd.xlane.f32.xlu0 %v860
      %v862 = vpop.xlane.xlu0 %861
      %v863 = vadd.f32 %v500, %v501
      %864 = vadd.xlane.f32.xlu0 %v863
      %v865 = vpop.xlane.xlu0 %864
      %v866 = vadd.f32 %v502, %v503
      %867 = vadd.xlane.f32.xlu0 %v866
      %v868 = vpop.xlane.xlu0 %867
      %v869 = vadd.f32 %v504, %v505
      %870 = vadd.xlane.f32.xlu0 %v869
      %v871 = vpop.xlane.xlu0 %870
      %v872 = vadd.f32 %v506, %v507
      %873 = vadd.xlane.f32.xlu0 %v872
      %v874 = vpop.xlane.xlu0 %873
      %v875 = vadd.f32 %v508, %v509
      %876 = vadd.xlane.f32.xlu0 %v875
      %v877 = vpop.xlane.xlu0 %876
      %v878 = vadd.f32 %v510, %v511
      %879 = vadd.xlane.f32.xlu0 %v878
      %v880 = vpop.xlane.xlu0 %879
      %v881 = vadd.f32 %v512, %v513
      %882 = vadd.xlane.f32.xlu0 %v881
      %v883 = vpop.xlane.xlu0 %882
      %v884 = vadd.f32 %v514, %v515
      %885 = vadd.xlane.f32.xlu0 %v884
      %v886 = vpop.xlane.xlu0 %885
      %v887 = vadd.f32 %v516, %v517
      %888 = vadd.xlane.f32.xlu0 %v887
      %v889 = vpop.xlane.xlu0 %888
      %v890 = vadd.f32 %v518, %v519
      %891 = vadd.xlane.f32.xlu0 %v890
      %v892 = vpop.xlane.xlu0 %891
      %v893 = vadd.f32 %v520, %v521
      %894 = vadd.xlane.f32.xlu0 %v893
      %v895 = vpop.xlane.xlu0 %894
      %v896 = vadd.f32 %v522, %v523
      %897 = vadd.xlane.f32.xlu0 %v896
      %v898 = vpop.xlane.xlu0 %897
      %v899 = vadd.f32 %v524, %v525
      %900 = vadd.xlane.f32.xlu0 %v899
      %v901 = vpop.xlane.xlu0 %900
      %v902 = vadd.f32 %v526, %v527
      %903 = vadd.xlane.f32.xlu0 %v902
      %v904 = vpop.xlane.xlu0 %903
      %v905 = vadd.f32 %v528, %v529
      %906 = vadd.xlane.f32.xlu0 %v905
      %v907 = vpop.xlane.xlu0 %906
      %v908 = vadd.f32 %v530, %v531
      %909 = vadd.xlane.f32.xlu0 %v908
      %v910 = vpop.xlane.xlu0 %909
      %v911 = vadd.f32 %v532, %v533
      %912 = vadd.xlane.f32.xlu0 %v911
      %v913 = vpop.xlane.xlu0 %912
      %v914 = vadd.f32 %v534, %v535
      %915 = vadd.xlane.f32.xlu0 %v914
      %v916 = vpop.xlane.xlu0 %915
      %v917 = vadd.f32 %v536, %v537
      %918 = vadd.xlane.f32.xlu0 %v917
      %v919 = vpop.xlane.xlu0 %918
      %v920 = vadd.f32 %v538, %v539
      %921 = vadd.xlane.f32.xlu0 %v920
      %v922 = vpop.xlane.xlu0 %921
      %v923 = vadd.f32 %v540, %v541
      %924 = vadd.xlane.f32.xlu0 %v923
      %v925 = vpop.xlane.xlu0 %924
      %v926 = vmax.f32 %v544, 1e-24
      %v927 = vmax.f32 %v547, 1e-24
      %v928 = vmax.f32 %v550, 1e-24
      %v929 = vmax.f32 %v553, 1e-24
      %v930 = vmax.f32 %v556, 1e-24
      %v931 = vmax.f32 %v559, 1e-24
      %v932 = vmax.f32 %v562, 1e-24
      %v933 = vmax.f32 %v565, 1e-24
      %v934 = vmax.f32 %v568, 1e-24
      %v935 = vmax.f32 %v571, 1e-24
      %v936 = vmax.f32 %v574, 1e-24
      %v937 = vmax.f32 %v577, 1e-24
      %v938 = vmax.f32 %v580, 1e-24
      %v939 = vmax.f32 %v583, 1e-24
      %v940 = vmax.f32 %v586, 1e-24
      %v941 = vmax.f32 %v589, 1e-24
      %v942 = vmax.f32 %v592, 1e-24
      %v943 = vmax.f32 %v595, 1e-24
      %v944 = vmax.f32 %v598, 1e-24
      %v945 = vmax.f32 %v601, 1e-24
      %v946 = vmax.f32 %v604, 1e-24
      %v947 = vmax.f32 %v607, 1e-24
      %v948 = vmax.f32 %v610, 1e-24
      %v949 = vmax.f32 %v613, 1e-24
      %v950 = vmax.f32 %v616, 1e-24
      %v951 = vmax.f32 %v619, 1e-24
      %v952 = vmax.f32 %v622, 1e-24
      %v953 = vmax.f32 %v625, 1e-24
      %v954 = vmax.f32 %v628, 1e-24
      %v955 = vmax.f32 %v631, 1e-24
      %v956 = vmax.f32 %v634, 1e-24
      %v957 = vmax.f32 %v637, 1e-24
      %v958 = vmax.f32 %v640, 1e-24
      %v959 = vmax.f32 %v643, 1e-24
      %v960 = vmax.f32 %v646, 1e-24
      %v961 = vmax.f32 %v649, 1e-24
      %v962 = vmax.f32 %v652, 1e-24
      %v963 = vmax.f32 %v655, 1e-24
      %v964 = vmax.f32 %v658, 1e-24
      %v965 = vmax.f32 %v661, 1e-24
      %v966 = vmax.f32 %v664, 1e-24
      %v967 = vmax.f32 %v667, 1e-24
      %v968 = vmax.f32 %v670, 1e-24
      %v969 = vmax.f32 %v673, 1e-24
      %v970 = vmax.f32 %v676, 1e-24
      %v971 = vmax.f32 %v679, 1e-24
      %v972 = vmax.f32 %v682, 1e-24
      %v973 = vmax.f32 %v685, 1e-24
      %v974 = vmax.f32 %v688, 1e-24
      %v975 = vmax.f32 %v691, 1e-24
      %v976 = vmax.f32 %v694, 1e-24
      %v977 = vmax.f32 %v697, 1e-24
      %v978 = vmax.f32 %v700, 1e-24
      %v979 = vmax.f32 %v703, 1e-24
      %v980 = vmax.f32 %v706, 1e-24
      %v981 = vmax.f32 %v709, 1e-24
      %v982 = vmax.f32 %v712, 1e-24
      %v983 = vmax.f32 %v715, 1e-24
      %v984 = vmax.f32 %v718, 1e-24
      %v985 = vmax.f32 %v721, 1e-24
      %v986 = vmax.f32 %v724, 1e-24
      %v987 = vmax.f32 %v727, 1e-24
      %v988 = vmax.f32 %v730, 1e-24
      %v989 = vmax.f32 %v733, 1e-24
      %v990 = vmax.f32 %v736, 1e-24
      %v991 = vmax.f32 %v739, 1e-24
      %v992 = vmax.f32 %v742, 1e-24
      %v993 = vmax.f32 %v745, 1e-24
      %v994 = vmax.f32 %v748, 1e-24
      %v995 = vmax.f32 %v751, 1e-24
      %v996 = vmax.f32 %v754, 1e-24
      %v997 = vmax.f32 %v757, 1e-24
      %v998 = vmax.f32 %v760, 1e-24
      %v999 = vmax.f32 %v763, 1e-24
      %v1000 = vmax.f32 %v766, 1e-24
      %v1001 = vmax.f32 %v769, 1e-24
      %v1002 = vmax.f32 %v772, 1e-24
      %v1003 = vmax.f32 %v775, 1e-24
      %v1004 = vmax.f32 %v778, 1e-24
      %v1005 = vmax.f32 %v781, 1e-24
      %v1006 = vmax.f32 %v784, 1e-24
      %v1007 = vmax.f32 %v787, 1e-24
      %v1008 = vmax.f32 %v790, 1e-24
      %v1009 = vmax.f32 %v793, 1e-24
      %v1010 = vmax.f32 %v796, 1e-24
      %v1011 = vmax.f32 %v799, 1e-24
      %v1012 = vmax.f32 %v802, 1e-24
      %v1013 = vmax.f32 %v805, 1e-24
      %v1014 = vmax.f32 %v808, 1e-24
      %v1015 = vmax.f32 %v811, 1e-24
      %v1016 = vmax.f32 %v814, 1e-24
      %v1017 = vmax.f32 %v817, 1e-24
      %v1018 = vmax.f32 %v820, 1e-24
      %v1019 = vmax.f32 %v823, 1e-24
      %v1020 = vmax.f32 %v826, 1e-24
      %v1021 = vmax.f32 %v829, 1e-24
      %v1022 = vmax.f32 %v832, 1e-24
      %v1023 = vmax.f32 %v835, 1e-24
      %v1024 = vmax.f32 %v838, 1e-24
      %v1025 = vmax.f32 %v841, 1e-24
      %v1026 = vmax.f32 %v844, 1e-24
      %v1027 = vmax.f32 %v847, 1e-24
      %v1028 = vmax.f32 %v850, 1e-24
      %v1029 = vmax.f32 %v853, 1e-24
      %v1030 = vmax.f32 %v856, 1e-24
      %v1031 = vmax.f32 %v859, 1e-24
      %v1032 = vmax.f32 %v862, 1e-24
      %v1033 = vmax.f32 %v865, 1e-24
      %v1034 = vmax.f32 %v868, 1e-24
      %v1035 = vmax.f32 %v871, 1e-24
      %v1036 = vmax.f32 %v874, 1e-24
      %v1037 = vmax.f32 %v877, 1e-24
      %v1038 = vmax.f32 %v880, 1e-24
      %v1039 = vmax.f32 %v883, 1e-24
      %v1040 = vmax.f32 %v886, 1e-24
      %v1041 = vmax.f32 %v889, 1e-24
      %v1042 = vmax.f32 %v892, 1e-24
      %v1043 = vmax.f32 %v895, 1e-24
      %v1044 = vmax.f32 %v898, 1e-24
      %v1045 = vmax.f32 %v901, 1e-24
      %v1046 = vmax.f32 %v904, 1e-24
      %v1047 = vmax.f32 %v907, 1e-24
      %v1048 = vmax.f32 %v910, 1e-24
      %v1049 = vmax.f32 %v913, 1e-24
      %v1050 = vmax.f32 %v916, 1e-24
      %v1051 = vmax.f32 %v919, 1e-24
      %v1052 = vmax.f32 %v922, 1e-24
      %v1053 = vmax.f32 %v925, 1e-24
      %v1054 = vrsqrt.pop %v926
      %v1055 = vrsqrt.pop %v927
      %v1056 = vrsqrt.pop %v928
      %v1057 = vrsqrt.pop %v929
      %v1058 = vrsqrt.pop %v930
      %v1059 = vrsqrt.pop %v931
      %v1060 = vrsqrt.pop %v932
      %v1061 = vrsqrt.pop %v933
      %v1062 = vrsqrt.pop %v934
      %v1063 = vrsqrt.pop %v935
      %v1064 = vrsqrt.pop %v936
      %v1065 = vrsqrt.pop %v937
      %v1066 = vrsqrt.pop %v938
      %v1067 = vrsqrt.pop %v939
      %v1068 = vrsqrt.pop %v940
      %v1069 = vrsqrt.pop %v941
      %v1070 = vrsqrt.pop %v942
      %v1071 = vrsqrt.pop %v943
      %v1072 = vrsqrt.pop %v944
      %v1073 = vrsqrt.pop %v945
      %v1074 = vrsqrt.pop %v946
      %v1075 = vrsqrt.pop %v947
      %v1076 = vrsqrt.pop %v948
      %v1077 = vrsqrt.pop %v949
      %v1078 = vrsqrt.pop %v950
      %v1079 = vrsqrt.pop %v951
      %v1080 = vrsqrt.pop %v952
      %v1081 = vrsqrt.pop %v953
      %v1082 = vrsqrt.pop %v954
      %v1083 = vrsqrt.pop %v955
      %v1084 = vrsqrt.pop %v956
      %v1085 = vrsqrt.pop %v957
      %v1086 = vrsqrt.pop %v958
      %v1087 = vrsqrt.pop %v959
      %v1088 = vrsqrt.pop %v960
      %v1089 = vrsqrt.pop %v961
      %v1090 = vrsqrt.pop %v962
      %v1091 = vrsqrt.pop %v963
      %v1092 = vrsqrt.pop %v964
      %v1093 = vrsqrt.pop %v965
      %v1094 = vrsqrt.pop %v966
      %v1095 = vrsqrt.pop %v967
      %v1096 = vrsqrt.pop %v968
      %v1097 = vrsqrt.pop %v969
      %v1098 = vrsqrt.pop %v970
      %v1099 = vrsqrt.pop %v971
      %v1100 = vrsqrt.pop %v972
      %v1101 = vrsqrt.pop %v973
      %v1102 = vrsqrt.pop %v974
      %v1103 = vrsqrt.pop %v975
      %v1104 = vrsqrt.pop %v976
      %v1105 = vrsqrt.pop %v977
      %v1106 = vrsqrt.pop %v978
      %v1107 = vrsqrt.pop %v979
      %v1108 = vrsqrt.pop %v980
      %v1109 = vrsqrt.pop %v981
      %v1110 = vrsqrt.pop %v982
      %v1111 = vrsqrt.pop %v983
      %v1112 = vrsqrt.pop %v984
      %v1113 = vrsqrt.pop %v985
      %v1114 = vrsqrt.pop %v986
      %v1115 = vrsqrt.pop %v987
      %v1116 = vrsqrt.pop %v988
      %v1117 = vrsqrt.pop %v989
      %v1118 = vrsqrt.pop %v990
      %v1119 = vrsqrt.pop %v991
      %v1120 = vrsqrt.pop %v992
      %v1121 = vrsqrt.pop %v993
      %v1122 = vrsqrt.pop %v994
      %v1123 = vrsqrt.pop %v995
      %v1124 = vrsqrt.pop %v996
      %v1125 = vrsqrt.pop %v997
      %v1126 = vrsqrt.pop %v998
      %v1127 = vrsqrt.pop %v999
      %v1128 = vrsqrt.pop %v1000
      %v1129 = vrsqrt.pop %v1001
      %v1130 = vrsqrt.pop %v1002
      %v1131 = vrsqrt.pop %v1003
      %v1132 = vrsqrt.pop %v1004
      %v1133 = vrsqrt.pop %v1005
      %v1134 = vrsqrt.pop %v1006
      %v1135 = vrsqrt.pop %v1007
      %v1136 = vrsqrt.pop %v1008
      %v1137 = vrsqrt.pop %v1009
      %v1138 = vrsqrt.pop %v1010
      %v1139 = vrsqrt.pop %v1011
      %v1140 = vrsqrt.pop %v1012
      %v1141 = vrsqrt.pop %v1013
      %v1142 = vrsqrt.pop %v1014
      %v1143 = vrsqrt.pop %v1015
      %v1144 = vrsqrt.pop %v1016
      %v1145 = vrsqrt.pop %v1017
      %v1146 = vrsqrt.pop %v1018
      %v1147 = vrsqrt.pop %v1019
      %v1148 = vrsqrt.pop %v1020
      %v1149 = vrsqrt.pop %v1021
      %v1150 = vrsqrt.pop %v1022
      %v1151 = vrsqrt.pop %v1023
      %v1152 = vrsqrt.pop %v1024
      %v1153 = vrsqrt.pop %v1025
      %v1154 = vrsqrt.pop %v1026
      %v1155 = vrsqrt.pop %v1027
      %v1156 = vrsqrt.pop %v1028
      %v1157 = vrsqrt.pop %v1029
      %v1158 = vrsqrt.pop %v1030
      %v1159 = vrsqrt.pop %v1031
      %v1160 = vrsqrt.pop %v1032
      %v1161 = vrsqrt.pop %v1033
      %v1162 = vrsqrt.pop %v1034
      %v1163 = vrsqrt.pop %v1035
      %v1164 = vrsqrt.pop %v1036
      %v1165 = vrsqrt.pop %v1037
      %v1166 = vrsqrt.pop %v1038
      %v1167 = vrsqrt.pop %v1039
      %v1168 = vrsqrt.pop %v1040
      %v1169 = vrsqrt.pop %v1041
      %v1170 = vrsqrt.pop %v1042
      %v1171 = vrsqrt.pop %v1043
      %v1172 = vrsqrt.pop %v1044
      %v1173 = vrsqrt.pop %v1045
      %v1174 = vrsqrt.pop %v1046
      %v1175 = vrsqrt.pop %v1047
      %v1176 = vrsqrt.pop %v1048
      %v1177 = vrsqrt.pop %v1049
      %v1178 = vrsqrt.pop %v1050
      %v1179 = vrsqrt.pop %v1051
      %v1180 = vrsqrt.pop %v1052
      %v1181 = vrsqrt.pop %v1053
      %1182 = vxpose.xlu0.b32.start [1/16] %v1054, 128
      %1183 = vxpose.xlu0.b32.cont [2/16] %v1055, 128
      %1184 = vxpose.xlu0.b32.cont [3/16] %v1056, 128
      %1185 = vxpose.xlu0.b32.cont [4/16] %v1057, 128
      %1186 = vxpose.xlu0.b32.cont [5/16] %v1058, 128
      %1187 = vxpose.xlu0.b32.cont [6/16] %v1059, 128
      %1188 = vxpose.xlu0.b32.cont [7/16] %v1060, 128
      %1189 = vxpose.xlu0.b32.cont [8/16] %v1061, 128
      %1190 = vxpose.xlu0.b32.cont [9/16] %v1062, 128
      %1191 = vxpose.xlu0.b32.cont [10/16] %v1063, 128
      %1192 = vxpose.xlu0.b32.cont [11/16] %v1064, 128
      %1193 = vxpose.xlu0.b32.cont [12/16] %v1065, 128
      %1194 = vxpose.xlu0.b32.cont [13/16] %v1066, 128
      %1195 = vxpose.xlu0.b32.cont [14/16] %v1067, 128
      %1196 = vxpose.xlu0.b32.cont [15/16] %v1068, 128
      %1197 = vxpose.xlu0.b32.end [16/16] %v1069, 128
      %v1198 = vpop.trf.xlu0
      %v1199 = vpop.trf.xlu0
      %v1200 = vpop.trf.xlu0
      %v1201 = vpop.trf.xlu0
      %v1202 = vpop.trf.xlu0
      %v1203 = vpop.trf.xlu0
      %v1204 = vpop.trf.xlu0
      %v1205 = vpop.trf.xlu0
      %v1206 = vpop.trf.xlu0
      %v1207 = vpop.trf.xlu0
      %v1208 = vpop.trf.xlu0
      %v1209 = vpop.trf.xlu0
      %v1210 = vpop.trf.xlu0
      %v1211 = vpop.trf.xlu0
      %v1212 = vpop.trf.xlu0
      %v1213 = vpop.trf.xlu0
      %1214 = vxpose.xlu0.b32.start [1/16] %v1070, 128
      %1215 = vxpose.xlu0.b32.cont [2/16] %v1071, 128
      %1216 = vxpose.xlu0.b32.cont [3/16] %v1072, 128
      %1217 = vxpose.xlu0.b32.cont [4/16] %v1073, 128
      %1218 = vxpose.xlu0.b32.cont [5/16] %v1074, 128
      %1219 = vxpose.xlu0.b32.cont [6/16] %v1075, 128
      %1220 = vxpose.xlu0.b32.cont [7/16] %v1076, 128
      %1221 = vxpose.xlu0.b32.cont [8/16] %v1077, 128
      %1222 = vxpose.xlu0.b32.cont [9/16] %v1078, 128
      %1223 = vxpose.xlu0.b32.cont [10/16] %v1079, 128
      %1224 = vxpose.xlu0.b32.cont [11/16] %v1080, 128
      %1225 = vxpose.xlu0.b32.cont [12/16] %v1081, 128
      %1226 = vxpose.xlu0.b32.cont [13/16] %v1082, 128
      %1227 = vxpose.xlu0.b32.cont [14/16] %v1083, 128
      %1228 = vxpose.xlu0.b32.cont [15/16] %v1084, 128
      %1229 = vxpose.xlu0.b32.end [16/16] %v1085, 128
      %v1230 = vpop.trf.xlu0
      %v1231 = vpop.trf.xlu0
      %v1232 = vpop.trf.xlu0
      %v1233 = vpop.trf.xlu0
      %v1234 = vpop.trf.xlu0
      %v1235 = vpop.trf.xlu0
      %v1236 = vpop.trf.xlu0
      %v1237 = vpop.trf.xlu0
      %v1238 = vpop.trf.xlu0
      %v1239 = vpop.trf.xlu0
      %v1240 = vpop.trf.xlu0
      %v1241 = vpop.trf.xlu0
      %v1242 = vpop.trf.xlu0
      %v1243 = vpop.trf.xlu0
      %v1244 = vpop.trf.xlu0
      %v1245 = vpop.trf.xlu0
      %1246 = vxpose.xlu0.b32.start [1/16] %v1086, 128
      %1247 = vxpose.xlu0.b32.cont [2/16] %v1087, 128
      %1248 = vxpose.xlu0.b32.cont [3/16] %v1088, 128
      %1249 = vxpose.xlu0.b32.cont [4/16] %v1089, 128
      %1250 = vxpose.xlu0.b32.cont [5/16] %v1090, 128
      %1251 = vxpose.xlu0.b32.cont [6/16] %v1091, 128
      %1252 = vxpose.xlu0.b32.cont [7/16] %v1092, 128
      %1253 = vxpose.xlu0.b32.cont [8/16] %v1093, 128
      %1254 = vxpose.xlu0.b32.cont [9/16] %v1094, 128
      %1255 = vxpose.xlu0.b32.cont [10/16] %v1095, 128
      %1256 = vxpose.xlu0.b32.cont [11/16] %v1096, 128
      %1257 = vxpose.xlu0.b32.cont [12/16] %v1097, 128
      %1258 = vxpose.xlu0.b32.cont [13/16] %v1098, 128
      %1259 = vxpose.xlu0.b32.cont [14/16] %v1099, 128
      %1260 = vxpose.xlu0.b32.cont [15/16] %v1100, 128
      %1261 = vxpose.xlu0.b32.end [16/16] %v1101, 128
      %v1262 = vpop.trf.xlu0
      %v1263 = vpop.trf.xlu0
      %v1264 = vpop.trf.xlu0
      %v1265 = vpop.trf.xlu0
      %v1266 = vpop.trf.xlu0
      %v1267 = vpop.trf.xlu0
      %v1268 = vpop.trf.xlu0
      %v1269 = vpop.trf.xlu0
      %v1270 = vpop.trf.xlu0
      %v1271 = vpop.trf.xlu0
      %v1272 = vpop.trf.xlu0
      %v1273 = vpop.trf.xlu0
      %v1274 = vpop.trf.xlu0
      %v1275 = vpop.trf.xlu0
      %v1276 = vpop.trf.xlu0
      %v1277 = vpop.trf.xlu0
      %1278 = vxpose.xlu0.b32.start [1/16] %v1102, 128
      %1279 = vxpose.xlu0.b32.cont [2/16] %v1103, 128
      %1280 = vxpose.xlu0.b32.cont [3/16] %v1104, 128
      %1281 = vxpose.xlu0.b32.cont [4/16] %v1105, 128
      %1282 = vxpose.xlu0.b32.cont [5/16] %v1106, 128
      %1283 = vxpose.xlu0.b32.cont [6/16] %v1107, 128
      %1284 = vxpose.xlu0.b32.cont [7/16] %v1108, 128
      %1285 = vxpose.xlu0.b32.cont [8/16] %v1109, 128
      %1286 = vxpose.xlu0.b32.cont [9/16] %v1110, 128
      %1287 = vxpose.xlu0.b32.cont [10/16] %v1111, 128
      %1288 = vxpose.xlu0.b32.cont [11/16] %v1112, 128
      %1289 = vxpose.xlu0.b32.cont [12/16] %v1113, 128
      %1290 = vxpose.xlu0.b32.cont [13/16] %v1114, 128
      %1291 = vxpose.xlu0.b32.cont [14/16] %v1115, 128
      %1292 = vxpose.xlu0.b32.cont [15/16] %v1116, 128
      %1293 = vxpose.xlu0.b32.end [16/16] %v1117, 128
      %v1294 = vpop.trf.xlu0
      %v1295 = vpop.trf.xlu0
      %v1296 = vpop.trf.xlu0
      %v1297 = vpop.trf.xlu0
      %v1298 = vpop.trf.xlu0
      %v1299 = vpop.trf.xlu0
      %v1300 = vpop.trf.xlu0
      %v1301 = vpop.trf.xlu0
      %v1302 = vpop.trf.xlu0
      %v1303 = vpop.trf.xlu0
      %v1304 = vpop.trf.xlu0
      %v1305 = vpop.trf.xlu0
      %v1306 = vpop.trf.xlu0
      %v1307 = vpop.trf.xlu0
      %v1308 = vpop.trf.xlu0
      %v1309 = vpop.trf.xlu0
      %1310 = vxpose.xlu0.b32.start [1/16] %v1118, 128
      %1311 = vxpose.xlu0.b32.cont [2/16] %v1119, 128
      %1312 = vxpose.xlu0.b32.cont [3/16] %v1120, 128
      %1313 = vxpose.xlu0.b32.cont [4/16] %v1121, 128
      %1314 = vxpose.xlu0.b32.cont [5/16] %v1122, 128
      %1315 = vxpose.xlu0.b32.cont [6/16] %v1123, 128
      %1316 = vxpose.xlu0.b32.cont [7/16] %v1124, 128
      %1317 = vxpose.xlu0.b32.cont [8/16] %v1125, 128
      %1318 = vxpose.xlu0.b32.cont [9/16] %v1126, 128
      %1319 = vxpose.xlu0.b32.cont [10/16] %v1127, 128
      %1320 = vxpose.xlu0.b32.cont [11/16] %v1128, 128
      %1321 = vxpose.xlu0.b32.cont [12/16] %v1129, 128
      %1322 = vxpose.xlu0.b32.cont [13/16] %v1130, 128
      %1323 = vxpose.xlu0.b32.cont [14/16] %v1131, 128
      %1324 = vxpose.xlu0.b32.cont [15/16] %v1132, 128
      %1325 = vxpose.xlu0.b32.end [16/16] %v1133, 128
      %v1326 = vpop.trf.xlu0
      %v1327 = vpop.trf.xlu0
      %v1328 = vpop.trf.xlu0
      %v1329 = vpop.trf.xlu0
      %v1330 = vpop.trf.xlu0
      %v1331 = vpop.trf.xlu0
      %v1332 = vpop.trf.xlu0
      %v1333 = vpop.trf.xlu0
      %v1334 = vpop.trf.xlu0
      %v1335 = vpop.trf.xlu0
      %v1336 = vpop.trf.xlu0
      %v1337 = vpop.trf.xlu0
      %v1338 = vpop.trf.xlu0
      %v1339 = vpop.trf.xlu0
      %v1340 = vpop.trf.xlu0
      %v1341 = vpop.trf.xlu0
      %1342 = vxpose.xlu0.b32.start [1/16] %v1134, 128
      %1343 = vxpose.xlu0.b32.cont [2/16] %v1135, 128
      %1344 = vxpose.xlu0.b32.cont [3/16] %v1136, 128
      %1345 = vxpose.xlu0.b32.cont [4/16] %v1137, 128
      %1346 = vxpose.xlu0.b32.cont [5/16] %v1138, 128
      %1347 = vxpose.xlu0.b32.cont [6/16] %v1139, 128
      %1348 = vxpose.xlu0.b32.cont [7/16] %v1140, 128
      %1349 = vxpose.xlu0.b32.cont [8/16] %v1141, 128
      %1350 = vxpose.xlu0.b32.cont [9/16] %v1142, 128
      %1351 = vxpose.xlu0.b32.cont [10/16] %v1143, 128
      %1352 = vxpose.xlu0.b32.cont [11/16] %v1144, 128
      %1353 = vxpose.xlu0.b32.cont [12/16] %v1145, 128
      %1354 = vxpose.xlu0.b32.cont [13/16] %v1146, 128
      %1355 = vxpose.xlu0.b32.cont [14/16] %v1147, 128
      %1356 = vxpose.xlu0.b32.cont [15/16] %v1148, 128
      %1357 = vxpose.xlu0.b32.end [16/16] %v1149, 128
      %v1358 = vpop.trf.xlu0
      %v1359 = vpop.trf.xlu0
      %v1360 = vpop.trf.xlu0
      %v1361 = vpop.trf.xlu0
      %v1362 = vpop.trf.xlu0
      %v1363 = vpop.trf.xlu0
      %v1364 = vpop.trf.xlu0
      %v1365 = vpop.trf.xlu0
      %v1366 = vpop.trf.xlu0
      %v1367 = vpop.trf.xlu0
      %v1368 = vpop.trf.xlu0
      %v1369 = vpop.trf.xlu0
      %v1370 = vpop.trf.xlu0
      %v1371 = vpop.trf.xlu0
      %v1372 = vpop.trf.xlu0
      %v1373 = vpop.trf.xlu0
      %1374 = vxpose.xlu0.b32.start [1/16] %v1150, 128
      %1375 = vxpose.xlu0.b32.cont [2/16] %v1151, 128
      %1376 = vxpose.xlu0.b32.cont [3/16] %v1152, 128
      %1377 = vxpose.xlu0.b32.cont [4/16] %v1153, 128
      %1378 = vxpose.xlu0.b32.cont [5/16] %v1154, 128
      %1379 = vxpose.xlu0.b32.cont [6/16] %v1155, 128
      %1380 = vxpose.xlu0.b32.cont [7/16] %v1156, 128
      %1381 = vxpose.xlu0.b32.cont [8/16] %v1157, 128
      %1382 = vxpose.xlu0.b32.cont [9/16] %v1158, 128
      %1383 = vxpose.xlu0.b32.cont [10/16] %v1159, 128
      %1384 = vxpose.xlu0.b32.cont [11/16] %v1160, 128
      %1385 = vxpose.xlu0.b32.cont [12/16] %v1161, 128
      %1386 = vxpose.xlu0.b32.cont [13/16] %v1162, 128
      %1387 = vxpose.xlu0.b32.cont [14/16] %v1163, 128
      %1388 = vxpose.xlu0.b32.cont [15/16] %v1164, 128
      %1389 = vxpose.xlu0.b32.end [16/16] %v1165, 128
      %v1390 = vpop.trf.xlu0
      %v1391 = vpop.trf.xlu0
      %v1392 = vpop.trf.xlu0
      %v1393 = vpop.trf.xlu0
      %v1394 = vpop.trf.xlu0
      %v1395 = vpop.trf.xlu0
      %v1396 = vpop.trf.xlu0
      %v1397 = vpop.trf.xlu0
      %v1398 = vpop.trf.xlu0
      %v1399 = vpop.trf.xlu0
      %v1400 = vpop.trf.xlu0
      %v1401 = vpop.trf.xlu0
      %v1402 = vpop.trf.xlu0
      %v1403 = vpop.trf.xlu0
      %v1404 = vpop.trf.xlu0
      %v1405 = vpop.trf.xlu0
      %1406 = vxpose.xlu0.b32.start [1/16] %v1166, 128
      %1407 = vxpose.xlu0.b32.cont [2/16] %v1167, 128
      %1408 = vxpose.xlu0.b32.cont [3/16] %v1168, 128
      %1409 = vxpose.xlu0.b32.cont [4/16] %v1169, 128
      %1410 = vxpose.xlu0.b32.cont [5/16] %v1170, 128
      %1411 = vxpose.xlu0.b32.cont [6/16] %v1171, 128
      %1412 = vxpose.xlu0.b32.cont [7/16] %v1172, 128
      %1413 = vxpose.xlu0.b32.cont [8/16] %v1173, 128
      %1414 = vxpose.xlu0.b32.cont [9/16] %v1174, 128
      %1415 = vxpose.xlu0.b32.cont [10/16] %v1175, 128
      %1416 = vxpose.xlu0.b32.cont [11/16] %v1176, 128
      %1417 = vxpose.xlu0.b32.cont [12/16] %v1177, 128
      %1418 = vxpose.xlu0.b32.cont [13/16] %v1178, 128
      %1419 = vxpose.xlu0.b32.cont [14/16] %v1179, 128
      %1420 = vxpose.xlu0.b32.cont [15/16] %v1180, 128
      %1421 = vxpose.xlu0.b32.end [16/16] %v1181, 128
      %v1422 = vpop.trf.xlu0
      %v1423 = vpop.trf.xlu0
      %v1424 = vpop.trf.xlu0
      %v1425 = vpop.trf.xlu0
      %v1426 = vpop.trf.xlu0
      %v1427 = vpop.trf.xlu0
      %v1428 = vpop.trf.xlu0
      %v1429 = vpop.trf.xlu0
      %v1430 = vpop.trf.xlu0
      %v1431 = vpop.trf.xlu0
      %v1432 = vpop.trf.xlu0
      %v1433 = vpop.trf.xlu0
      %v1434 = vpop.trf.xlu0
      %v1435 = vpop.trf.xlu0
      %v1436 = vpop.trf.xlu0
      %v1437 = vpop.trf.xlu0
      %v1446 = vcombine.low %v1198, %v1230
      %v1447 = vcombine.low %v1262, %v1294
      %v1448 = vcombine.low %v1326, %v1358
      %v1449 = vcombine.low %v1390, %v1422
      %v1451 = vunpack.c.l.s4 1966171168
      %v1452 = vunpack.c.0.s8 %v1451
      %v1453 = vlaneseq
      %v1454 = vshrl.u32 %v1453, 7
      %v1455 = vsub.s32 %v1452, %v1454
      %v1456 = vrot.slane %v1446, %v1455
      %v1458 = vunpack.c.l.s4 1966171168
      %v1459 = vunpack.c.0.s8 %v1458
      %v1460 = vlaneseq
      %v1461 = vshrl.u32 %v1460, 7
      %v1462 = vsub.s32 %v1459, %v1461
      %v1463 = vrot.slane %v1447, %v1462
      %v1465 = vunpack.c.l.s4 1966171168
      %v1466 = vunpack.c.0.s8 %v1465
      %v1467 = vlaneseq
      %v1468 = vshrl.u32 %v1467, 7
      %v1469 = vsub.s32 %v1466, %v1468
      %v1470 = vrot.slane %v1448, %v1469
      %v1472 = vunpack.c.l.s4 1966171168
      %v1473 = vunpack.c.0.s8 %v1472
      %v1474 = vlaneseq
      %v1475 = vshrl.u32 %v1474, 7
      %v1476 = vsub.s32 %v1473, %v1475
      %v1477 = vrot.slane %v1449, %v1476
      %v1478 = vcombine.low %v1456, %v1463
      %v1479 = vcombine.low %v1470, %v1477
      %v1481 = vunpack.c.l.s4 1966171168
      %v1482 = vunpack.c.0.s8 %v1481
      %v1483 = vlaneseq
      %v1484 = vshrl.u32 %v1483, 7
      %v1485 = vsub.s32 %v1482, %v1484
      %v1486 = vrot.slane %v1478, %v1485
      %v1488 = vunpack.c.l.s4 1966171168
      %v1489 = vunpack.c.0.s8 %v1488
      %v1490 = vlaneseq
      %v1491 = vshrl.u32 %v1490, 7
      %v1492 = vsub.s32 %v1489, %v1491
      %v1493 = vrot.slane %v1479, %v1492
      %v1494 = vcombine.low %v1486, %v1493
      %1496 = vst [vmem:[#allocation2] sm:$0xff] %v1494
    $region17: #{proxy_linear.1} parent=1 // pred_fallthru
      _
    %v1497 = vld [vmem:[%s0] sm:$0xff]
    %v1498 = vld [vmem:[%s0 + $0x8] sm:$0xff]
    %v1499 = vld [vmem:[#allocation3] sm:$0xff]
    %v1500 = vld [vmem:[#allocation3 + $0x8] sm:$0xff]
    %v1501 = vld [vmem:[#allocation3 + $0x10] sm:$0xff]
    %v1502 = vld [vmem:[#allocation3 + $0x18] sm:$0xff]
    %v1503 = vld [vmem:[#allocation3 + $0x20] sm:$0xff]
    %v1504 = vld [vmem:[#allocation3 + $0x28] sm:$0xff]
    %v1505 = vld [vmem:[#allocation3 + $0x30] sm:$0xff]
    %v1506 = vld [vmem:[#allocation3 + $0x38] sm:$0xff]
    %v1507 = vld [vmem:[#allocation3 + $0x40] sm:$0xff]
    %v1508 = vld [vmem:[#allocation3 + $0x48] sm:$0xff]
    %v1509 = vld [vmem:[#allocation3 + $0x50] sm:$0xff]
    %v1510 = vld [vmem:[#allocation3 + $0x58] sm:$0xff]
    %v1511 = vld [vmem:[#allocation3 + $0x60] sm:$0xff]
    %v1512 = vld [vmem:[#allocation3 + $0x68] sm:$0xff]
    %v1513 = vld [vmem:[#allocation3 + $0x70] sm:$0xff]
    %v1514 = vld [vmem:[#allocation3 + $0x78] sm:$0xff]
    %v1515 = vld [vmem:[#allocation3 + $0x80] sm:$0xff]
    %v1516 = vld [vmem:[#allocation3 + $0x88] sm:$0xff]
    %v1517 = vld [vmem:[#allocation3 + $0x90] sm:$0xff]
    %v1518 = vld [vmem:[#allocation3 + $0x98] sm:$0xff]
    %v1519 = vld [vmem:[#allocation3 + $0xa0] sm:$0xff]
    %v1520 = vld [vmem:[#allocation3 + $0xa8] sm:$0xff]
    %v1521 = vld [vmem:[#allocation3 + $0xb0] sm:$0xff]
    %v1522 = vld [vmem:[#allocation3 + $0xb8] sm:$0xff]
    %v1523 = vld [vmem:[#allocation3 + $0xc0] sm:$0xff]
    %v1524 = vld [vmem:[#allocation3 + $0xc8] sm:$0xff]
    %v1525 = vld [vmem:[#allocation3 + $0xd0] sm:$0xff]
    %v1526 = vld [vmem:[#allocation3 + $0xd8] sm:$0xff]
    %v1527 = vld [vmem:[#allocation3 + $0xe0] sm:$0xff]
    %v1528 = vld [vmem:[#allocation3 + $0xe8] sm:$0xff]
    %v1529 = vld [vmem:[#allocation3 + $0xf0] sm:$0xff]
    %v1530 = vld [vmem:[#allocation3 + $0xf8] sm:$0xff]
    %v1531 = vld [vmem:[#allocation3 + $0x100] sm:$0xff]
    %v1532 = vld [vmem:[#allocation3 + $0x108] sm:$0xff]
    %v1533 = vld [vmem:[#allocation3 + $0x110] sm:$0xff]
    %v1534 = vld [vmem:[#allocation3 + $0x118] sm:$0xff]
    %v1535 = vld [vmem:[#allocation3 + $0x120] sm:$0xff]
    %v1536 = vld [vmem:[#allocation3 + $0x128] sm:$0xff]
    %v1537 = vld [vmem:[#allocation3 + $0x130] sm:$0xff]
    %v1538 = vld [vmem:[#allocation3 + $0x138] sm:$0xff]
    %v1539 = vld [vmem:[#allocation3 + $0x140] sm:$0xff]
    %v1540 = vld [vmem:[#allocation3 + $0x148] sm:$0xff]
    %v1541 = vld [vmem:[#allocation3 + $0x150] sm:$0xff]
    %v1542 = vld [vmem:[#allocation3 + $0x158] sm:$0xff]
    %v1543 = vld [vmem:[#allocation3 + $0x160] sm:$0xff]
    %v1544 = vld [vmem:[#allocation3 + $0x168] sm:$0xff]
    %v1545 = vld [vmem:[#allocation3 + $0x170] sm:$0xff]
    %v1546 = vld [vmem:[#allocation3 + $0x178] sm:$0xff]
    %v1547 = vld [vmem:[#allocation3 + $0x180] sm:$0xff]
    %v1548 = vld [vmem:[#allocation3 + $0x188] sm:$0xff]
    %v1549 = vld [vmem:[#allocation3 + $0x190] sm:$0xff]
    %v1550 = vld [vmem:[#allocation3 + $0x198] sm:$0xff]
    %v1551 = vld [vmem:[#allocation3 + $0x1a0] sm:$0xff]
    %v1552 = vld [vmem:[#allocation3 + $0x1a8] sm:$0xff]
    %v1553 = vld [vmem:[#allocation3 + $0x1b0] sm:$0xff]
    %v1554 = vld [vmem:[#allocation3 + $0x1b8] sm:$0xff]
    %v1555 = vld [vmem:[#allocation3 + $0x1c0] sm:$0xff]
    %v1556 = vld [vmem:[#allocation3 + $0x1c8] sm:$0xff]
    %v1557 = vld [vmem:[#allocation3 + $0x1d0] sm:$0xff]
    %v1558 = vld [vmem:[#allocation3 + $0x1d8] sm:$0xff]
    %v1559 = vld [vmem:[#allocation3 + $0x1e0] sm:$0xff]
    %v1560 = vld [vmem:[#allocation3 + $0x1e8] sm:$0xff]
    %v1561 = vld [vmem:[#allocation3 + $0x1f0] sm:$0xff]
    %v1562 = vld [vmem:[#allocation3 + $0x1f8] sm:$0xff]
    %v1563 = vld [vmem:[#allocation3 + $0x200] sm:$0xff]
    %v1564 = vld [vmem:[#allocation3 + $0x208] sm:$0xff]
    %v1565 = vld [vmem:[#allocation3 + $0x210] sm:$0xff]
    %v1566 = vld [vmem:[#allocation3 + $0x218] sm:$0xff]
    %v1567 = vld [vmem:[#allocation3 + $0x220] sm:$0xff]
    %v1568 = vld [vmem:[#allocation3 + $0x228] sm:$0xff]
    %v1569 = vld [vmem:[#allocation3 + $0x230] sm:$0xff]
    %v1570 = vld [vmem:[#allocation3 + $0x238] sm:$0xff]
    %v1571 = vld [vmem:[#allocation3 + $0x240] sm:$0xff]
    %v1572 = vld [vmem:[#allocation3 + $0x248] sm:$0xff]
    %v1573 = vld [vmem:[#allocation3 + $0x250] sm:$0xff]
    %v1574 = vld [vmem:[#allocation3 + $0x258] sm:$0xff]
    %v1575 = vld [vmem:[#allocation3 + $0x260] sm:$0xff]
    %v1576 = vld [vmem:[#allocation3 + $0x268] sm:$0xff]
    %v1577 = vld [vmem:[#allocation3 + $0x270] sm:$0xff]
    %v1578 = vld [vmem:[#allocation3 + $0x278] sm:$0xff]
    %v1579 = vld [vmem:[#allocation3 + $0x280] sm:$0xff]
    %v1580 = vld [vmem:[#allocation3 + $0x288] sm:$0xff]
    %v1581 = vld [vmem:[#allocation3 + $0x290] sm:$0xff]
    %v1582 = vld [vmem:[#allocation3 + $0x298] sm:$0xff]
    %v1583 = vld [vmem:[#allocation3 + $0x2a0] sm:$0xff]
    %v1584 = vld [vmem:[#allocation3 + $0x2a8] sm:$0xff]
    %v1585 = vld [vmem:[#allocation3 + $0x2b0] sm:$0xff]
    %v1586 = vld [vmem:[#allocation3 + $0x2b8] sm:$0xff]
    %v1587 = vld [vmem:[#allocation3 + $0x2c0] sm:$0xff]
    %v1588 = vld [vmem:[#allocation3 + $0x2c8] sm:$0xff]
    %v1589 = vld [vmem:[#allocation3 + $0x2d0] sm:$0xff]
    %v1590 = vld [vmem:[#allocation3 + $0x2d8] sm:$0xff]
    %v1591 = vld [vmem:[#allocation3 + $0x2e0] sm:$0xff]
    %v1592 = vld [vmem:[#allocation3 + $0x2e8] sm:$0xff]
    %v1593 = vld [vmem:[#allocation3 + $0x2f0] sm:$0xff]
    %v1594 = vld [vmem:[#allocation3 + $0x2f8] sm:$0xff]
    %v1595 = vld [vmem:[#allocation3 + $0x300] sm:$0xff]
    %v1596 = vld [vmem:[#allocation3 + $0x308] sm:$0xff]
    %v1597 = vld [vmem:[#allocation3 + $0x310] sm:$0xff]
    %v1598 = vld [vmem:[#allocation3 + $0x318] sm:$0xff]
    %v1599 = vld [vmem:[#allocation3 + $0x320] sm:$0xff]
    %v1600 = vld [vmem:[#allocation3 + $0x328] sm:$0xff]
    %v1601 = vld [vmem:[#allocation3 + $0x330] sm:$0xff]
    %v1602 = vld [vmem:[#allocation3 + $0x338] sm:$0xff]
    %v1603 = vld [vmem:[#allocation3 + $0x340] sm:$0xff]
    %v1604 = vld [vmem:[#allocation3 + $0x348] sm:$0xff]
    %v1605 = vld [vmem:[#allocation3 + $0x350] sm:$0xff]
    %v1606 = vld [vmem:[#allocation3 + $0x358] sm:$0xff]
    %v1607 = vld [vmem:[#allocation3 + $0x360] sm:$0xff]
    %v1608 = vld [vmem:[#allocation3 + $0x368] sm:$0xff]
    %v1609 = vld [vmem:[#allocation3 + $0x370] sm:$0xff]
    %v1610 = vld [vmem:[#allocation3 + $0x378] sm:$0xff]
    %v1611 = vld [vmem:[#allocation3 + $0x380] sm:$0xff]
    %v1612 = vld [vmem:[#allocation3 + $0x388] sm:$0xff]
    %v1613 = vld [vmem:[#allocation3 + $0x390] sm:$0xff]
    %v1614 = vld [vmem:[#allocation3 + $0x398] sm:$0xff]
    %v1615 = vld [vmem:[#allocation3 + $0x3a0] sm:$0xff]
    %v1616 = vld [vmem:[#allocation3 + $0x3a8] sm:$0xff]
    %v1617 = vld [vmem:[#allocation3 + $0x3b0] sm:$0xff]
    %v1618 = vld [vmem:[#allocation3 + $0x3b8] sm:$0xff]
    %v1619 = vld [vmem:[#allocation3 + $0x3c0] sm:$0xff]
    %v1620 = vld [vmem:[#allocation3 + $0x3c8] sm:$0xff]
    %v1621 = vld [vmem:[#allocation3 + $0x3d0] sm:$0xff]
    %v1622 = vld [vmem:[#allocation3 + $0x3d8] sm:$0xff]
    %v1623 = vld [vmem:[#allocation3 + $0x3e0] sm:$0xff]
    %v1624 = vld [vmem:[#allocation3 + $0x3e8] sm:$0xff]
    %v1625 = vld [vmem:[#allocation3 + $0x3f0] sm:$0xff]
    %v1626 = vld [vmem:[#allocation3 + $0x3f8] sm:$0xff]
    %v1627 = vld [vmem:[#allocation3 + $0x400] sm:$0xff]
    %v1628 = vld [vmem:[#allocation3 + $0x408] sm:$0xff]
    %v1629 = vld [vmem:[#allocation3 + $0x410] sm:$0xff]
    %v1630 = vld [vmem:[#allocation3 + $0x418] sm:$0xff]
    %v1631 = vld [vmem:[#allocation3 + $0x420] sm:$0xff]
    %v1632 = vld [vmem:[#allocation3 + $0x428] sm:$0xff]
    %v1633 = vld [vmem:[#allocation3 + $0x430] sm:$0xff]
    %v1634 = vld [vmem:[#allocation3 + $0x438] sm:$0xff]
    %v1635 = vld [vmem:[#allocation3 + $0x440] sm:$0xff]
    %v1636 = vld [vmem:[#allocation3 + $0x448] sm:$0xff]
    %v1637 = vld [vmem:[#allocation3 + $0x450] sm:$0xff]
    %v1638 = vld [vmem:[#allocation3 + $0x458] sm:$0xff]
    %v1639 = vld [vmem:[#allocation3 + $0x460] sm:$0xff]
    %v1640 = vld [vmem:[#allocation3 + $0x468] sm:$0xff]
    %v1641 = vld [vmem:[#allocation3 + $0x470] sm:$0xff]
    %v1642 = vld [vmem:[#allocation3 + $0x478] sm:$0xff]
    %v1643 = vld [vmem:[#allocation3 + $0x480] sm:$0xff]
    %v1644 = vld [vmem:[#allocation3 + $0x488] sm:$0xff]
    %v1645 = vld [vmem:[#allocation3 + $0x490] sm:$0xff]
    %v1646 = vld [vmem:[#allocation3 + $0x498] sm:$0xff]
    %v1647 = vld [vmem:[#allocation3 + $0x4a0] sm:$0xff]
    %v1648 = vld [vmem:[#allocation3 + $0x4a8] sm:$0xff]
    %v1649 = vld [vmem:[#allocation3 + $0x4b0] sm:$0xff]
    %v1650 = vld [vmem:[#allocation3 + $0x4b8] sm:$0xff]
    %v1651 = vld [vmem:[#allocation3 + $0x4c0] sm:$0xff]
    %v1652 = vld [vmem:[#allocation3 + $0x4c8] sm:$0xff]
    %v1653 = vld [vmem:[#allocation3 + $0x4d0] sm:$0xff]
    %v1654 = vld [vmem:[#allocation3 + $0x4d8] sm:$0xff]
    %v1655 = vld [vmem:[#allocation3 + $0x4e0] sm:$0xff]
    %v1656 = vld [vmem:[#allocation3 + $0x4e8] sm:$0xff]
    %v1657 = vld [vmem:[#allocation3 + $0x4f0] sm:$0xff]
    %v1658 = vld [vmem:[#allocation3 + $0x4f8] sm:$0xff]
    %v1659 = vld [vmem:[#allocation3 + $0x500] sm:$0xff]
    %v1660 = vld [vmem:[#allocation3 + $0x508] sm:$0xff]
    %v1661 = vld [vmem:[#allocation3 + $0x510] sm:$0xff]
    %v1662 = vld [vmem:[#allocation3 + $0x518] sm:$0xff]
    %v1663 = vld [vmem:[#allocation3 + $0x520] sm:$0xff]
    %v1664 = vld [vmem:[#allocation3 + $0x528] sm:$0xff]
    %v1665 = vld [vmem:[#allocation3 + $0x530] sm:$0xff]
    %v1666 = vld [vmem:[#allocation3 + $0x538] sm:$0xff]
    %v1667 = vld [vmem:[#allocation3 + $0x540] sm:$0xff]
    %v1668 = vld [vmem:[#allocation3 + $0x548] sm:$0xff]
    %v1669 = vld [vmem:[#allocation3 + $0x550] sm:$0xff]
    %v1670 = vld [vmem:[#allocation3 + $0x558] sm:$0xff]
    %v1671 = vld [vmem:[#allocation3 + $0x560] sm:$0xff]
    %v1672 = vld [vmem:[#allocation3 + $0x568] sm:$0xff]
    %v1673 = vld [vmem:[#allocation3 + $0x570] sm:$0xff]
    %v1674 = vld [vmem:[#allocation3 + $0x578] sm:$0xff]
    %v1675 = vld [vmem:[#allocation3 + $0x580] sm:$0xff]
    %v1676 = vld [vmem:[#allocation3 + $0x588] sm:$0xff]
    %v1677 = vld [vmem:[#allocation3 + $0x590] sm:$0xff]
    %v1678 = vld [vmem:[#allocation3 + $0x598] sm:$0xff]
    %v1679 = vld [vmem:[#allocation3 + $0x5a0] sm:$0xff]
    %v1680 = vld [vmem:[#allocation3 + $0x5a8] sm:$0xff]
    %v1681 = vld [vmem:[#allocation3 + $0x5b0] sm:$0xff]
    %v1682 = vld [vmem:[#allocation3 + $0x5b8] sm:$0xff]
    %v1683 = vld [vmem:[#allocation3 + $0x5c0] sm:$0xff]
    %v1684 = vld [vmem:[#allocation3 + $0x5c8] sm:$0xff]
    %v1685 = vld [vmem:[#allocation3 + $0x5d0] sm:$0xff]
    %v1686 = vld [vmem:[#allocation3 + $0x5d8] sm:$0xff]
    %v1687 = vld [vmem:[#allocation3 + $0x5e0] sm:$0xff]
    %v1688 = vld [vmem:[#allocation3 + $0x5e8] sm:$0xff]
    %v1689 = vld [vmem:[#allocation3 + $0x5f0] sm:$0xff]
    %v1690 = vld [vmem:[#allocation3 + $0x5f8] sm:$0xff]
    %v1691 = vld [vmem:[#allocation3 + $0x600] sm:$0xff]
    %v1692 = vld [vmem:[#allocation3 + $0x608] sm:$0xff]
    %v1693 = vld [vmem:[#allocation3 + $0x610] sm:$0xff]
    %v1694 = vld [vmem:[#allocation3 + $0x618] sm:$0xff]
    %v1695 = vld [vmem:[#allocation3 + $0x620] sm:$0xff]
    %v1696 = vld [vmem:[#allocation3 + $0x628] sm:$0xff]
    %v1697 = vld [vmem:[#allocation3 + $0x630] sm:$0xff]
    %v1698 = vld [vmem:[#allocation3 + $0x638] sm:$0xff]
    %v1699 = vld [vmem:[#allocation3 + $0x640] sm:$0xff]
    %v1700 = vld [vmem:[#allocation3 + $0x648] sm:$0xff]
    %v1701 = vld [vmem:[#allocation3 + $0x650] sm:$0xff]
    %v1702 = vld [vmem:[#allocation3 + $0x658] sm:$0xff]
    %v1703 = vld [vmem:[#allocation3 + $0x660] sm:$0xff]
    %v1704 = vld [vmem:[#allocation3 + $0x668] sm:$0xff]
    %v1705 = vld [vmem:[#allocation3 + $0x670] sm:$0xff]
    %v1706 = vld [vmem:[#allocation3 + $0x678] sm:$0xff]
    %v1707 = vld [vmem:[#allocation3 + $0x680] sm:$0xff]
    %v1708 = vld [vmem:[#allocation3 + $0x688] sm:$0xff]
    %v1709 = vld [vmem:[#allocation3 + $0x690] sm:$0xff]
    %v1710 = vld [vmem:[#allocation3 + $0x698] sm:$0xff]
    %v1711 = vld [vmem:[#allocation3 + $0x6a0] sm:$0xff]
    %v1712 = vld [vmem:[#allocation3 + $0x6a8] sm:$0xff]
    %v1713 = vld [vmem:[#allocation3 + $0x6b0] sm:$0xff]
    %v1714 = vld [vmem:[#allocation3 + $0x6b8] sm:$0xff]
    %v1715 = vld [vmem:[#allocation3 + $0x6c0] sm:$0xff]
    %v1716 = vld [vmem:[#allocation3 + $0x6c8] sm:$0xff]
    %v1717 = vld [vmem:[#allocation3 + $0x6d0] sm:$0xff]
    %v1718 = vld [vmem:[#allocation3 + $0x6d8] sm:$0xff]
    %v1719 = vld [vmem:[#allocation3 + $0x6e0] sm:$0xff]
    %v1720 = vld [vmem:[#allocation3 + $0x6e8] sm:$0xff]
    %v1721 = vld [vmem:[#allocation3 + $0x6f0] sm:$0xff]
    %v1722 = vld [vmem:[#allocation3 + $0x6f8] sm:$0xff]
    %v1723 = vld [vmem:[#allocation3 + $0x700] sm:$0xff]
    %v1724 = vld [vmem:[#allocation3 + $0x708] sm:$0xff]
    %v1725 = vld [vmem:[#allocation3 + $0x710] sm:$0xff]
    %v1726 = vld [vmem:[#allocation3 + $0x718] sm:$0xff]
    %v1727 = vld [vmem:[#allocation3 + $0x720] sm:$0xff]
    %v1728 = vld [vmem:[#allocation3 + $0x728] sm:$0xff]
    %v1729 = vld [vmem:[#allocation3 + $0x730] sm:$0xff]
    %v1730 = vld [vmem:[#allocation3 + $0x738] sm:$0xff]
    %v1731 = vld [vmem:[#allocation3 + $0x740] sm:$0xff]
    %v1732 = vld [vmem:[#allocation3 + $0x748] sm:$0xff]
    %v1733 = vld [vmem:[#allocation3 + $0x750] sm:$0xff]
    %v1734 = vld [vmem:[#allocation3 + $0x758] sm:$0xff]
    %v1735 = vld [vmem:[#allocation3 + $0x760] sm:$0xff]
    %v1736 = vld [vmem:[#allocation3 + $0x768] sm:$0xff]
    %v1737 = vld [vmem:[#allocation3 + $0x770] sm:$0xff]
    %v1738 = vld [vmem:[#allocation3 + $0x778] sm:$0xff]
    %v1739 = vld [vmem:[#allocation3 + $0x780] sm:$0xff]
    %v1740 = vld [vmem:[#allocation3 + $0x788] sm:$0xff]
    %v1741 = vld [vmem:[#allocation3 + $0x790] sm:$0xff]
    %v1742 = vld [vmem:[#allocation3 + $0x798] sm:$0xff]
    %v1743 = vld [vmem:[#allocation3 + $0x7a0] sm:$0xff]
    %v1744 = vld [vmem:[#allocation3 + $0x7a8] sm:$0xff]
    %v1745 = vld [vmem:[#allocation3 + $0x7b0] sm:$0xff]
    %v1746 = vld [vmem:[#allocation3 + $0x7b8] sm:$0xff]
    %v1747 = vld [vmem:[#allocation3 + $0x7c0] sm:$0xff]
    %v1748 = vld [vmem:[#allocation3 + $0x7c8] sm:$0xff]
    %v1749 = vld [vmem:[#allocation3 + $0x7d0] sm:$0xff]
    %v1750 = vld [vmem:[#allocation3 + $0x7d8] sm:$0xff]
    %v1751 = vld [vmem:[#allocation3 + $0x7e0] sm:$0xff]
    %v1752 = vld [vmem:[#allocation3 + $0x7e8] sm:$0xff]
    %v1753 = vld [vmem:[#allocation3 + $0x7f0] sm:$0xff]
    %v1754 = vld [vmem:[#allocation3 + $0x7f8] sm:$0xff]
    %1755 = vmatprep.subr.mxu0 %v1500
    %1756 = vmatpush1.xpose.msra.mxu0 %v1499
    %1757 = vmatprep.subr.mxu0 %v1502
    %1758 = vmatpush1.xpose.msra.mxu0 %v1501
    %1759 = vmatprep.subr.mxu0 %v1504
    %1760 = vmatpush1.xpose.msra.mxu0 %v1503
    %1761 = vmatprep.subr.mxu0 %v1506
    %1762 = vmatpush1.xpose.msra.mxu0 %v1505
    %1763 = vmatprep.subr.mxu0 %v1508
    %1764 = vmatpush1.xpose.msra.mxu0 %v1507
    %1765 = vmatprep.subr.mxu0 %v1510
    %1766 = vmatpush1.xpose.msra.mxu0 %v1509
    %1767 = vmatprep.subr.mxu0 %v1512
    %1768 = vmatpush1.xpose.msra.mxu0 %v1511
    %1769 = vmatprep.subr.mxu0 %v1514
    %1770 = vmatpush1.xpose.msra.mxu0 %v1513
    %1771 = vmatprep.subr.mxu0 %v1516
    %1772 = vmatpush1.xpose.msra.mxu0 %v1515
    %1773 = vmatprep.subr.mxu0 %v1518
    %1774 = vmatpush1.xpose.msra.mxu0 %v1517
    %1775 = vmatprep.subr.mxu0 %v1520
    %1776 = vmatpush1.xpose.msra.mxu0 %v1519
    %1777 = vmatprep.subr.mxu0 %v1522
    %1778 = vmatpush1.xpose.msra.mxu0 %v1521
    %1779 = vmatprep.subr.mxu0 %v1524
    %1780 = vmatpush1.xpose.msra.mxu0 %v1523
    %1781 = vmatprep.subr.mxu0 %v1526
    %1782 = vmatpush1.xpose.msra.mxu0 %v1525
    %1783 = vmatprep.subr.mxu0 %v1528
    %1784 = vmatpush1.xpose.msra.mxu0 %v1527
    %1785 = vmatprep.subr.mxu0 %v1530
    %1786 = vmatpush1.xpose.msra.mxu0 %v1529
    %1787 = vmatprep.subr.mxu0 %v1532
    %1788 = vmatpush1.xpose.msra.mxu0 %v1531
    %1789 = vmatprep.subr.mxu0 %v1534
    %1790 = vmatpush1.xpose.msra.mxu0 %v1533
    %1791 = vmatprep.subr.mxu0 %v1536
    %1792 = vmatpush1.xpose.msra.mxu0 %v1535
    %1793 = vmatprep.subr.mxu0 %v1538
    %1794 = vmatpush1.xpose.msra.mxu0 %v1537
    %1795 = vmatprep.subr.mxu0 %v1540
    %1796 = vmatpush1.xpose.msra.mxu0 %v1539
    %1797 = vmatprep.subr.mxu0 %v1542
    %1798 = vmatpush1.xpose.msra.mxu0 %v1541
    %1799 = vmatprep.subr.mxu0 %v1544
    %1800 = vmatpush1.xpose.msra.mxu0 %v1543
    %1801 = vmatprep.subr.mxu0 %v1546
    %1802 = vmatpush1.xpose.msra.mxu0 %v1545
    %1803 = vmatprep.subr.mxu0 %v1548
    %1804 = vmatpush1.xpose.msra.mxu0 %v1547
    %1805 = vmatprep.subr.mxu0 %v1550
    %1806 = vmatpush1.xpose.msra.mxu0 %v1549
    %1807 = vmatprep.subr.mxu0 %v1552
    %1808 = vmatpush1.xpose.msra.mxu0 %v1551
    %1809 = vmatprep.subr.mxu0 %v1554
    %1810 = vmatpush1.xpose.msra.mxu0 %v1553
    %1811 = vmatprep.subr.mxu0 %v1556
    %1812 = vmatpush1.xpose.msra.mxu0 %v1555
    %1813 = vmatprep.subr.mxu0 %v1558
    %1814 = vmatpush1.xpose.msra.mxu0 %v1557
    %1815 = vmatprep.subr.mxu0 %v1560
    %1816 = vmatpush1.xpose.msra.mxu0 %v1559
    %1817 = vmatprep.subr.mxu0 %v1562
    %1818 = vmatpush1.xpose.msra.mxu0 %v1561
    %1819 = vmatprep.mubr.f32.mxu0 %v1498
    %1820 = vmatmul.mubr.f32.gmra.mrb[0].mxu0 %v1497
    %v1821 = vpop.f32.mrb[0].mxu0
    %v1822 = vadd.f32 0.0, %v1821
    %v1823 = vpop.f32.mrb[0].mxu0
    %v1824 = vadd.f32 0.0, %v1823
    %1825 = vdwg.mxu0
    %1826 = vmatprep.subr.mxu0 %v1564
    %1827 = vmatpush1.xpose.msra.mxu0 %v1563
    %1828 = vmatprep.subr.mxu0 %v1566
    %1829 = vmatpush1.xpose.msra.mxu0 %v1565
    %1830 = vmatprep.subr.mxu0 %v1568
    %1831 = vmatpush1.xpose.msra.mxu0 %v1567
    %1832 = vmatprep.subr.mxu0 %v1570
    %1833 = vmatpush1.xpose.msra.mxu0 %v1569
    %1834 = vmatprep.subr.mxu0 %v1572
    %1835 = vmatpush1.xpose.msra.mxu0 %v1571
    %1836 = vmatprep.subr.mxu0 %v1574
    %1837 = vmatpush1.xpose.msra.mxu0 %v1573
    %1838 = vmatprep.subr.mxu0 %v1576
    %1839 = vmatpush1.xpose.msra.mxu0 %v1575
    %1840 = vmatprep.subr.mxu0 %v1578
    %1841 = vmatpush1.xpose.msra.mxu0 %v1577
    %1842 = vmatprep.subr.mxu0 %v1580
    %1843 = vmatpush1.xpose.msra.mxu0 %v1579
    %1844 = vmatprep.subr.mxu0 %v1582
    %1845 = vmatpush1.xpose.msra.mxu0 %v1581
    %1846 = vmatprep.subr.mxu0 %v1584
    %1847 = vmatpush1.xpose.msra.mxu0 %v1583
    %1848 = vmatprep.subr.mxu0 %v1586
    %1849 = vmatpush1.xpose.msra.mxu0 %v1585
    %1850 = vmatprep.subr.mxu0 %v1588
    %1851 = vmatpush1.xpose.msra.mxu0 %v1587
    %1852 = vmatprep.subr.mxu0 %v1590
    %1853 = vmatpush1.xpose.msra.mxu0 %v1589
    %1854 = vmatprep.subr.mxu0 %v1592
    %1855 = vmatpush1.xpose.msra.mxu0 %v1591
    %1856 = vmatprep.subr.mxu0 %v1594
    %1857 = vmatpush1.xpose.msra.mxu0 %v1593
    %1858 = vmatprep.subr.mxu0 %v1596
    %1859 = vmatpush1.xpose.msra.mxu0 %v1595
    %1860 = vmatprep.subr.mxu0 %v1598
    %1861 = vmatpush1.xpose.msra.mxu0 %v1597
    %1862 = vmatprep.subr.mxu0 %v1600
    %1863 = vmatpush1.xpose.msra.mxu0 %v1599
    %1864 = vmatprep.subr.mxu0 %v1602
    %1865 = vmatpush1.xpose.msra.mxu0 %v1601
    %1866 = vmatprep.subr.mxu0 %v1604
    %1867 = vmatpush1.xpose.msra.mxu0 %v1603
    %1868 = vmatprep.subr.mxu0 %v1606
    %1869 = vmatpush1.xpose.msra.mxu0 %v1605
    %1870 = vmatprep.subr.mxu0 %v1608
    %1871 = vmatpush1.xpose.msra.mxu0 %v1607
    %1872 = vmatprep.subr.mxu0 %v1610
    %1873 = vmatpush1.xpose.msra.mxu0 %v1609
    %1874 = vmatprep.subr.mxu0 %v1612
    %1875 = vmatpush1.xpose.msra.mxu0 %v1611
    %1876 = vmatprep.subr.mxu0 %v1614
    %1877 = vmatpush1.xpose.msra.mxu0 %v1613
    %1878 = vmatprep.subr.mxu0 %v1616
    %1879 = vmatpush1.xpose.msra.mxu0 %v1615
    %1880 = vmatprep.subr.mxu0 %v1618
    %1881 = vmatpush1.xpose.msra.mxu0 %v1617
    %1882 = vmatprep.subr.mxu0 %v1620
    %1883 = vmatpush1.xpose.msra.mxu0 %v1619
    %1884 = vmatprep.subr.mxu0 %v1622
    %1885 = vmatpush1.xpose.msra.mxu0 %v1621
    %1886 = vmatprep.subr.mxu0 %v1624
    %1887 = vmatpush1.xpose.msra.mxu0 %v1623
    %1888 = vmatprep.subr.mxu0 %v1626
    %1889 = vmatpush1.xpose.msra.mxu0 %v1625
    %1890 = vmatprep.mubr.f32.mxu0 %v1498
    %1891 = vmatmul.mubr.f32.gmra.mrb[0].mxu0 %v1497
    %v1892 = vpop.f32.mrb[0].mxu0
    %v1893 = vadd.f32 0.0, %v1892
    %v1894 = vpop.f32.mrb[0].mxu0
    %v1895 = vadd.f32 0.0, %v1894
    %1896 = vdwg.mxu0
    %1897 = vmatprep.subr.mxu0 %v1628
    %1898 = vmatpush1.xpose.msra.mxu0 %v1627
    %1899 = vmatprep.subr.mxu0 %v1630
    %1900 = vmatpush1.xpose.msra.mxu0 %v1629
    %1901 = vmatprep.subr.mxu0 %v1632
    %1902 = vmatpush1.xpose.msra.mxu0 %v1631
    %1903 = vmatprep.subr.mxu0 %v1634
    %1904 = vmatpush1.xpose.msra.mxu0 %v1633
    %1905 = vmatprep.subr.mxu0 %v1636
    %1906 = vmatpush1.xpose.msra.mxu0 %v1635
    %1907 = vmatprep.subr.mxu0 %v1638
    %1908 = vmatpush1.xpose.msra.mxu0 %v1637
    %1909 = vmatprep.subr.mxu0 %v1640
    %1910 = vmatpush1.xpose.msra.mxu0 %v1639
    %1911 = vmatprep.subr.mxu0 %v1642
    %1912 = vmatpush1.xpose.msra.mxu0 %v1641
    %1913 = vmatprep.subr.mxu0 %v1644
    %1914 = vmatpush1.xpose.msra.mxu0 %v1643
    %1915 = vmatprep.subr.mxu0 %v1646
    %1916 = vmatpush1.xpose.msra.mxu0 %v1645
    %1917 = vmatprep.subr.mxu0 %v1648
    %1918 = vmatpush1.xpose.msra.mxu0 %v1647
    %1919 = vmatprep.subr.mxu0 %v1650
    %1920 = vmatpush1.xpose.msra.mxu0 %v1649
    %1921 = vmatprep.subr.mxu0 %v1652
    %1922 = vmatpush1.xpose.msra.mxu0 %v1651
    %1923 = vmatprep.subr.mxu0 %v1654
    %1924 = vmatpush1.xpose.msra.mxu0 %v1653
    %1925 = vmatprep.subr.mxu0 %v1656
    %1926 = vmatpush1.xpose.msra.mxu0 %v1655
    %1927 = vmatprep.subr.mxu0 %v1658
    %1928 = vmatpush1.xpose.msra.mxu0 %v1657
    %1929 = vmatprep.subr.mxu0 %v1660
    %1930 = vmatpush1.xpose.msra.mxu0 %v1659
    %1931 = vmatprep.subr.mxu0 %v1662
    %1932 = vmatpush1.xpose.msra.mxu0 %v1661
    %1933 = vmatprep.subr.mxu0 %v1664
    %1934 = vmatpush1.xpose.msra.mxu0 %v1663
    %1935 = vmatprep.subr.mxu0 %v1666
    %1936 = vmatpush1.xpose.msra.mxu0 %v1665
    %1937 = vmatprep.subr.mxu0 %v1668
    %1938 = vmatpush1.xpose.msra.mxu0 %v1667
    %1939 = vmatprep.subr.mxu0 %v1670
    %1940 = vmatpush1.xpose.msra.mxu0 %v1669
    %1941 = vmatprep.subr.mxu0 %v1672
    %1942 = vmatpush1.xpose.msra.mxu0 %v1671
    %1943 = vmatprep.subr.mxu0 %v1674
    %1944 = vmatpush1.xpose.msra.mxu0 %v1673
    %1945 = vmatprep.subr.mxu0 %v1676
    %1946 = vmatpush1.xpose.msra.mxu0 %v1675
    %1947 = vmatprep.subr.mxu0 %v1678
    %1948 = vmatpush1.xpose.msra.mxu0 %v1677
    %1949 = vmatprep.subr.mxu0 %v1680
    %1950 = vmatpush1.xpose.msra.mxu0 %v1679
    %1951 = vmatprep.subr.mxu0 %v1682
    %1952 = vmatpush1.xpose.msra.mxu0 %v1681
    %1953 = vmatprep.subr.mxu0 %v1684
    %1954 = vmatpush1.xpose.msra.mxu0 %v1683
    %1955 = vmatprep.subr.mxu0 %v1686
    %1956 = vmatpush1.xpose.msra.mxu0 %v1685
    %1957 = vmatprep.subr.mxu0 %v1688
    %1958 = vmatpush1.xpose.msra.mxu0 %v1687
    %1959 = vmatprep.subr.mxu0 %v1690
    %1960 = vmatpush1.xpose.msra.mxu0 %v1689
    %1961 = vmatprep.mubr.f32.mxu0 %v1498
    %1962 = vmatmul.mubr.f32.gmra.mrb[0].mxu0 %v1497
    %v1963 = vpop.f32.mrb[0].mxu0
    %v1964 = vadd.f32 0.0, %v1963
    %v1965 = vpop.f32.mrb[0].mxu0
    %v1966 = vadd.f32 0.0, %v1965
    %1967 = vdwg.mxu0
    %1968 = vmatprep.subr.mxu0 %v1692
    %1969 = vmatpush1.xpose.msra.mxu0 %v1691
    %1970 = vmatprep.subr.mxu0 %v1694
    %1971 = vmatpush1.xpose.msra.mxu0 %v1693
    %1972 = vmatprep.subr.mxu0 %v1696
    %1973 = vmatpush1.xpose.msra.mxu0 %v1695
    %1974 = vmatprep.subr.mxu0 %v1698
    %1975 = vmatpush1.xpose.msra.mxu0 %v1697
    %1976 = vmatprep.subr.mxu0 %v1700
    %1977 = vmatpush1.xpose.msra.mxu0 %v1699
    %1978 = vmatprep.subr.mxu0 %v1702
    %1979 = vmatpush1.xpose.msra.mxu0 %v1701
    %1980 = vmatprep.subr.mxu0 %v1704
    %1981 = vmatpush1.xpose.msra.mxu0 %v1703
    %1982 = vmatprep.subr.mxu0 %v1706
    %1983 = vmatpush1.xpose.msra.mxu0 %v1705
    %1984 = vmatprep.subr.mxu0 %v1708
    %1985 = vmatpush1.xpose.msra.mxu0 %v1707
    %1986 = vmatprep.subr.mxu0 %v1710
    %1987 = vmatpush1.xpose.msra.mxu0 %v1709
    %1988 = vmatprep.subr.mxu0 %v1712
    %1989 = vmatpush1.xpose.msra.mxu0 %v1711
    %1990 = vmatprep.subr.mxu0 %v1714
    %1991 = vmatpush1.xpose.msra.mxu0 %v1713
    %1992 = vmatprep.subr.mxu0 %v1716
    %1993 = vmatpush1.xpose.msra.mxu0 %v1715
    %1994 = vmatprep.subr.mxu0 %v1718
    %1995 = vmatpush1.xpose.msra.mxu0 %v1717
    %1996 = vmatprep.subr.mxu0 %v1720
    %1997 = vmatpush1.xpose.msra.mxu0 %v1719
    %1998 = vmatprep.subr.mxu0 %v1722
    %1999 = vmatpush1.xpose.msra.mxu0 %v1721
    %2000 = vmatprep.subr.mxu0 %v1724
    %2001 = vmatpush1.xpose.msra.mxu0 %v1723
    %2002 = vmatprep.subr.mxu0 %v1726
    %2003 = vmatpush1.xpose.msra.mxu0 %v1725
    %2004 = vmatprep.subr.mxu0 %v1728
    %2005 = vmatpush1.xpose.msra.mxu0 %v1727
    %2006 = vmatprep.subr.mxu0 %v1730
    %2007 = vmatpush1.xpose.msra.mxu0 %v1729
    %2008 = vmatprep.subr.mxu0 %v1732
    %2009 = vmatpush1.xpose.msra.mxu0 %v1731
    %2010 = vmatprep.subr.mxu0 %v1734
    %2011 = vmatpush1.xpose.msra.mxu0 %v1733
    %2012 = vmatprep.subr.mxu0 %v1736
    %2013 = vmatpush1.xpose.msra.mxu0 %v1735
    %2014 = vmatprep.subr.mxu0 %v1738
    %2015 = vmatpush1.xpose.msra.mxu0 %v1737
    %2016 = vmatprep.subr.mxu0 %v1740
    %2017 = vmatpush1.xpose.msra.mxu0 %v1739
    %2018 = vmatprep.subr.mxu0 %v1742
    %2019 = vmatpush1.xpose.msra.mxu0 %v1741
    %2020 = vmatprep.subr.mxu0 %v1744
    %2021 = vmatpush1.xpose.msra.mxu0 %v1743
    %2022 = vmatprep.subr.mxu0 %v1746
    %2023 = vmatpush1.xpose.msra.mxu0 %v1745
    %2024 = vmatprep.subr.mxu0 %v1748
    %2025 = vmatpush1.xpose.msra.mxu0 %v1747
    %2026 = vmatprep.subr.mxu0 %v1750
    %2027 = vmatpush1.xpose.msra.mxu0 %v1749
    %2028 = vmatprep.subr.mxu0 %v1752
    %2029 = vmatpush1.xpose.msra.mxu0 %v1751
    %2030 = vmatprep.subr.mxu0 %v1754
    %2031 = vmatpush1.xpose.msra.mxu0 %v1753
    %2032 = vmatprep.mubr.f32.mxu0 %v1498
    %2033 = vmatmul.mubr.f32.gmra.mrb[0].mxu0 %v1497
    %v2034 = vpop.f32.mrb[0].mxu0
    %v2035 = vadd.f32 0.0, %v2034
    %v2036 = vpop.f32.mrb[0].mxu0
    %v2037 = vadd.f32 0.0, %v2036
    %2038 = vdwg.mxu0
    %v2039 = vld [vmem:[#allocation2] sm:$0xff]
    %v2041 = vlaneseq
    %v2042 = vshrl.u32 %v2041, 7
    %v2043 = vsub.s32 0, %v2042
    %v2044 = vrot.slane %v2039, %v2043
    %v2045 = vlaneseq
    %v2046 = vshrl.u32 %v2045, 7
    %v2047 = vsub.s32 1, %v2046
    %v2048 = vrot.slane %v2039, %v2047
    %v2049 = vlaneseq
    %v2050 = vshrl.u32 %v2049, 7
    %v2051 = vsub.s32 2, %v2050
    %v2052 = vrot.slane %v2039, %v2051
    %v2053 = vlaneseq
    %v2054 = vshrl.u32 %v2053, 7
    %v2055 = vsub.s32 3, %v2054
    %v2056 = vrot.slane %v2039, %v2055
    %v2057 = vlaneseq
    %v2058 = vshrl.u32 %v2057, 7
    %v2059 = vsub.s32 4, %v2058
    %v2060 = vrot.slane %v2039, %v2059
    %v2061 = vlaneseq
    %v2062 = vshrl.u32 %v2061, 7
    %v2063 = vsub.s32 5, %v2062
    %v2064 = vrot.slane %v2039, %v2063
    %v2065 = vlaneseq
    %v2066 = vshrl.u32 %v2065, 7
    %v2067 = vsub.s32 6, %v2066
    %v2068 = vrot.slane %v2039, %v2067
    %v2069 = vlaneseq
    %v2070 = vshrl.u32 %v2069, 7
    %v2071 = vsub.s32 7, %v2070
    %v2072 = vrot.slane %v2039, %v2071
    %v2081 = vmul.f32 %v1822, %v2044
    %v2082 = vmul.f32 %v1824, %v2048
    %v2083 = vmul.f32 %v1893, %v2052
    %v2084 = vmul.f32 %v1895, %v2056
    %v2085 = vmul.f32 %v1964, %v2060
    %v2086 = vmul.f32 %v1966, %v2064
    %v2087 = vmul.f32 %v2035, %v2068
    %v2088 = vmul.f32 %v2037, %v2072
    %2089 = vst [vmem:[#allocation6] sm:$0xff] %v2081
    %2090 = vst [vmem:[#allocation6 + $0x8] sm:$0xff] %v2082
    %2091 = vst [vmem:[#allocation6 + $0x10] sm:$0xff] %v2083
    %2092 = vst [vmem:[#allocation6 + $0x18] sm:$0xff] %v2084
    %2093 = vst [vmem:[#allocation6 + $0x20] sm:$0xff] %v2085
    %2094 = vst [vmem:[#allocation6 + $0x28] sm:$0xff] %v2086
    %2095 = vst [vmem:[#allocation6 + $0x30] sm:$0xff] %v2087
    %2096 = vst [vmem:[#allocation6 + $0x38] sm:$0xff] %v2088
    // Predicated region
    $region18: #{proxy_linear.1} parent=1 // pred_check
      _
    $region19: #{proxy_linear.1} parent=1 // pred_check_branch
      %2098 = sbr.rel (0) target = $region21
    $region20: #{proxy_linear.1} parent=1 // pred_region
      %s2100 = ssub.s32 1024, 1024
      %2101 = vsyncadd [#allocation5], %s2100
      %s2103 = sshll.u32 [#allocation6], 4
      %s2104 = int_to_ptr.vmem [resolvable:$true] %s2103
      %2106 = dma.vmem_to_hbm [thread:$0]  %s2104, 1024, %s2, [#allocation5]
    $region21: #{proxy_linear.1} parent=1 // pred_fallthru
      _
    // Predicated region
    $region22: #{proxy_linear.1} parent=1 // pred_check
      _
    $region23: #{proxy_linear.1} parent=1 // pred_check_branch
      %2108 = sbr.rel (0) target = $region25
    $region24: #{proxy_linear.1} parent=1 // pred_region
      %2109 = dma.done [#allocation5], 1024
    $region25: #{proxy_linear.1} parent=1 // pred_fallthru
      _
    %2110 = vsyncpa [#allocation4], 1
    %2111 = vsyncpa [#allocation5], 1

</llo_original>
